<compile_context>
chip_gen: v6e
topology: v6e:2x2x1
jax: 0.10.0
libtpu: 0.0.40
codegen_flags: <defaults>
</compile_context>

<pallas_src>
import functools

import jax
import jax.numpy as jnp
from jax.experimental import pallas as pl
from jax.experimental.pallas import tpu as pltpu


def lstm_model_kernel(x_ref,
                      wih0_ref, whh0_ref, b0_ref,
                      w1_ref, b1_ref,
                      fc1w_ref, fc1b_ref, fc2w_ref, fc2b_ref,
                      o_ref,
                      *, seq_len, batch, hidden_dim):
    T, B, H = seq_len, batch, hidden_dim

    # ---- Prologue: layer-0 input projection for ALL timesteps at once ----
    # (T*B, D) @ (D, 4H) + fused bias -- no recurrent dependency.
    xp = (jnp.dot(x_ref[...], wih0_ref[...], preferred_element_type=jnp.float32)
          + b0_ref[...])

    # Loop-invariant weights loaded once.
    # TODO(synk): drive whh0 / w1 weight-stationary on the MXU via
    # pltpu.matmul_push_rhs / matmul_acc_lhs / matmul_pop to avoid re-loading
    # the RHS into the systolic array every step (M=B=2 is push-dominated).
    whh0 = whh0_ref[...]
    w1 = w1_ref[...]
    # Hoist the layer-1 bias broadcast out of the unrolled recurrence.
    b1 = jnp.broadcast_to(b1_ref[...], (B, 4 * H))

    def gates_to_state(gates, c_prev):
        # Gate layout (wrapper-permuted): [i | f | o | g'], where the g' columns
        # of W/b were pre-scaled by 2 so tanh(g) == 2*sigmoid(g') - 1.
        # -> a single EUP sigmoid pass covers all 4H lanes.
        s = jax.nn.sigmoid(gates)
        i = s[:, 0 * H:1 * H]
        f = s[:, 1 * H:2 * H]
        o = s[:, 2 * H:3 * H]
        g = 2.0 * s[:, 3 * H:4 * H] - 1.0
        c_new = f * c_prev + i * g
        h_new = o * jnp.tanh(c_new)
        return h_new, c_new

    zeros = jnp.zeros((B, H), jnp.float32)
    h1, c1, h2, c2 = zeros, zeros, zeros, zeros
    h2_steps = []

    # T is small and static: fully unrolled recurrence; only the h @ W matmuls
    # and the gate nonlinearities remain on the serial critical path.
    for t in range(T):
        gates0 = xp[t * B:(t + 1) * B, :] + jnp.dot(
            h1, whh0, preferred_element_type=jnp.float32)
        h1, c1 = gates_to_state(gates0, c1)

        # Layer 1: single fused K=2H matmul over the concatenated [h1 | h2].
        gates1 = jnp.dot(jnp.concatenate([h1, h2], axis=1), w1,
                         preferred_element_type=jnp.float32) + b1
        h2, c2 = gates_to_state(gates1, c2)
        h2_steps.append(h2)

    # ---- Epilogue: FC head applied once on the whole (T*B, H) slab ----
    hs = jnp.concatenate(h2_steps, axis=0)          # stays in registers
    y = (jnp.dot(hs, fc1w_ref[...], preferred_element_type=jnp.float32)
         + fc1b_ref[...])
    y = jnp.where(y > 0, y, 0.01 * y)               # leaky_relu (slope 0.01)
    # dropout1 is identity in eval mode.
    # fc2 has a single output column -> VPU multiply + lane reduction instead
    # of an MXU pass with N=1.
    z = jnp.sum(y * fc2w_ref[...], axis=-1, keepdims=True) + fc2b_ref[...]
    o_ref[...] = jax.nn.sigmoid(z)                  # single output store


def lstm_model_forward(x, params, hidden_dim=64):
    """x: (B, T, D) float32 -> (B, T, 1) float32."""
    B, T, D = x.shape
    H = hidden_dim
    (wih0, whh0, bih0, bhh0,
     wih1, whh1, bih1, bhh1,
     fc1_w, fc1_b, fc2_w, fc2_b) = params

    # Time-major, flattened to (T*B, D) so the input projection is one matmul.
    x_flat = jnp.transpose(x, (1, 0, 2)).reshape(T * B, D)

    def prep_w(w):
        # PyTorch gate order [i|f|g|o] (rows) -> transpose to (K, 4H) and
        # permute columns to [i|f|o|g], scaling the g columns by 2 so the
        # kernel can compute tanh(g) = 2*sigmoid(2g) - 1 in one sigmoid pass.
        wt = w.T
        return jnp.concatenate(
            [wt[:, 0:2 * H], wt[:, 3 * H:4 * H], 2.0 * wt[:, 2 * H:3 * H]],
            axis=1)

    def prep_b(bih, bhh):
        b = (bih + bhh).reshape(1, 4 * H)
        return jnp.concatenate(
            [b[:, 0:2 * H], b[:, 3 * H:4 * H], 2.0 * b[:, 2 * H:3 * H]],
            axis=1)

    wih0_t = prep_w(wih0)                              # (D, 4H)
    whh0_t = prep_w(whh0)                              # (H, 4H)
    b0 = prep_b(bih0, bhh0)                            # (1, 4H)
    # Layer 1: stack input & recurrent weights vertically -> one K=2H matmul.
    w1 = jnp.concatenate([prep_w(wih1), prep_w(whh1)], axis=0)   # (2H, 4H)
    b1 = prep_b(bih1, bhh1)                            # (1, 4H)
    fc1w_t = fc1_w.T                                   # (H, H//2)
    fc1b = fc1_b.reshape(1, H // 2)
    fc2w_row = fc2_w.reshape(1, H // 2)                # row vector for VPU path
    fc2b = fc2_b.reshape(1, 1)

    vmem = pl.BlockSpec(memory_space=pltpu.MemorySpace.VMEM)

    # TODO(synk): for many independent streams add a leading "parallel" grid
    # axis (or core_map over create_tensorcore_mesh) so v7x's second TensorCore
    # takes half of them; at B=2 there isn't enough work to amortize it.
    out = pl.pallas_call(
        functools.partial(lstm_model_kernel, seq_len=T, batch=B, hidden_dim=H),
        out_shape=jax.ShapeDtypeStruct((T * B, 1), jnp.float32),
        in_specs=[vmem] * 10,
        out_specs=vmem,
        compiler_params=pltpu.CompilerParams(vmem_limit_bytes=2 * 1024 * 1024),
    )(x_flat, wih0_t, whh0_t, b0, w1, b1, fc1w_t, fc1b, fc2w_row, fc2b)

    return jnp.transpose(out.reshape(T, B, 1), (1, 0, 2))   # (B, T, 1)


def init_params(key, input_dim=40, hidden_dim=64):
    """Deterministic PyTorch-style init (uniform(-k, k))."""
    H = hidden_dim
    ks = jax.random.split(key, 12)
    k_lstm = 1.0 / jnp.sqrt(H)

    def u(k, shape, bound):
        return jax.random.uniform(k, shape, jnp.float32, -bound, bound)

    wih0 = u(ks[0], (4 * H, input_dim), k_lstm)
    whh0 = u(ks[1], (4 * H, H), k_lstm)
    bih0 = u(ks[2], (4 * H,), k_lstm)
    bhh0 = u(ks[3], (4 * H,), k_lstm)
    wih1 = u(ks[4], (4 * H, H), k_lstm)
    whh1 = u(ks[5], (4 * H, H), k_lstm)
    bih1 = u(ks[6], (4 * H,), k_lstm)
    bhh1 = u(ks[7], (4 * H,), k_lstm)
    k_fc1 = 1.0 / jnp.sqrt(H)
    fc1_w = u(ks[8], (H // 2, H), k_fc1)
    fc1_b = u(ks[9], (H // 2,), k_fc1)
    k_fc2 = 1.0 / jnp.sqrt(H // 2)
    fc2_w = u(ks[10], (1, H // 2), k_fc2)
    fc2_b = u(ks[11], (1,), k_fc2)
    return (wih0, whh0, bih0, bhh0, wih1, whh1, bih1, bhh1,
            fc1_w, fc1_b, fc2_w, fc2_b)


def reference_forward(x, params, hidden_dim=64):
    """Pure-JAX reference (PyTorch semantics) for correctness check."""
    H = hidden_dim
    (wih0, whh0, bih0, bhh0, wih1, whh1, bih1, bhh1,
     fc1_w, fc1_b, fc2_w, fc2_b) = params
    B, T, D = x.shape

    def cell(x_t, h, c, wih, whh, bih, bhh):
        g = x_t @ wih.T + h @ whh.T + bih + bhh
        i, f, gg, o = jnp.split(g, 4, axis=-1)
        i, f, o = jax.nn.sigmoid(i), jax.nn.sigmoid(f), jax.nn.sigmoid(o)
        gg = jnp.tanh(gg)
        c = f * c + i * gg
        h = o * jnp.tanh(c)
        return h, c

    def step(carry, x_t):
        h1, c1, h2, c2 = carry
        h1, c1 = cell(x_t, h1, c1, wih0, whh0, bih0, bhh0)
        h2, c2 = cell(h1, h2, c2, wih1, whh1, bih1, bhh1)
        return (h1, c1, h2, c2), h2

    zeros = jnp.zeros((B, H), jnp.float32)
    _, hs = jax.lax.scan(step, (zeros, zeros, zeros, zeros),
                         jnp.transpose(x, (1, 0, 2)))
    hs = jnp.transpose(hs, (1, 0, 2))              # (B, T, H)
    y = hs @ fc1_w.T + fc1_b
    y = jnp.where(y > 0, y, 0.01 * y)
    # dropout is identity in eval mode
    z = y @ fc2_w.T + fc2_b
    return jax.nn.sigmoid(z)


if __name__ == "__main__":
    B, T, D, H = 2, 8, 40, 64
    key = jax.random.PRNGKey(0)
    kx, kp = jax.random.split(key)
    x = jax.random.normal(kx, (B, T, D), jnp.float32)
    params = init_params(kp, input_dim=D, hidden_dim=H)

    out = jax.block_until_ready(lstm_model_forward(x, params, hidden_dim=H))
    ref = jax.block_until_ready(reference_forward(x, params, hidden_dim=H))

    assert out.shape == (B, T, 1), out.shape
    assert jnp.allclose(out, ref, atol=2e-3, rtol=2e-3), \
        f"max abs diff {jnp.max(jnp.abs(out - ref))}"
    print("KERNEL_OK")
</pallas_src>

<mosaic_0001>
module attributes {stable_mosaic.version = 11 : i64} {
  func.func @lstm_model_kernel(%arg0: memref<16x40xf32, #tpu.memory_space<vmem>>, %arg1: memref<40x256xf32, #tpu.memory_space<vmem>>, %arg2: memref<64x256xf32, #tpu.memory_space<vmem>>, %arg3: memref<1x256xf32, #tpu.memory_space<vmem>>, %arg4: memref<128x256xf32, #tpu.memory_space<vmem>>, %arg5: memref<1x256xf32, #tpu.memory_space<vmem>>, %arg6: memref<64x32xf32, #tpu.memory_space<vmem>>, %arg7: memref<1x32xf32, #tpu.memory_space<vmem>>, %arg8: memref<1x32xf32, #tpu.memory_space<vmem>>, %arg9: memref<1x1xf32, #tpu.memory_space<vmem>>, %arg10: memref<16x1xf32, #tpu.memory_space<vmem>>) attributes {dimension_semantics = [], scalar_prefetch = 0 : i64, scratch_operands = 0 : i64, tpu.core_type = #tpu.core_type<tc>} {
    %c0 = arith.constant 0 : index
    %c0_0 = arith.constant 0 : index
    %0 = vector.load %arg0[%c0, %c0_0] : memref<16x40xf32, #tpu.memory_space<vmem>>, vector<16x40xf32>
    %c0_1 = arith.constant 0 : index
    %c0_2 = arith.constant 0 : index
    %1 = vector.load %arg1[%c0_1, %c0_2] : memref<40x256xf32, #tpu.memory_space<vmem>>, vector<40x256xf32>
    %cst = arith.constant dense<0.000000e+00> : vector<16x256xf32>
    %2 = tpu.matmul %0, %1, %cst {dimension_numbers = #tpu.dot_dimension_numbers<[1], [0], [0], [1], [0, 0, 1, 1], [], []>} : vector<16x40xf32>, vector<40x256xf32>, vector<16x256xf32> -> vector<16x256xf32>
    %c0_3 = arith.constant 0 : index
    %c0_4 = arith.constant 0 : index
    %3 = vector.load %arg3[%c0_3, %c0_4] : memref<1x256xf32, #tpu.memory_space<vmem>>, vector<1x256xf32>
    %4 = vector.broadcast %3 : vector<1x256xf32> to vector<16x256xf32>
    %5 = arith.addf %2, %4 : vector<16x256xf32>
    %c0_5 = arith.constant 0 : index
    %c0_6 = arith.constant 0 : index
    %6 = vector.load %arg2[%c0_5, %c0_6] : memref<64x256xf32, #tpu.memory_space<vmem>>, vector<64x256xf32>
    %c0_7 = arith.constant 0 : index
    %c0_8 = arith.constant 0 : index
    %7 = vector.load %arg4[%c0_7, %c0_8] : memref<128x256xf32, #tpu.memory_space<vmem>>, vector<128x256xf32>
    %c0_9 = arith.constant 0 : index
    %c0_10 = arith.constant 0 : index
    %8 = vector.load %arg5[%c0_9, %c0_10] : memref<1x256xf32, #tpu.memory_space<vmem>>, vector<1x256xf32>
    %9 = vector.shape_cast %8 : vector<1x256xf32> to vector<1x256xf32>
    %10 = vector.broadcast %9 : vector<1x256xf32> to vector<2x256xf32>
    %cst_11 = arith.constant 0.000000e+00 : f32
    %11 = vector.broadcast %cst_11 : f32 to vector<2x64xf32>
    %12 = vector.extract_strided_slice %5 {offsets = [0, 0], sizes = [2, 256], strides = [1, 1]} : vector<16x256xf32> to vector<2x256xf32>
    %cst_12 = arith.constant dense<0.000000e+00> : vector<2x256xf32>
    %13 = tpu.matmul %11, %6, %cst_12 {dimension_numbers = #tpu.dot_dimension_numbers<[1], [0], [0], [1], [0, 0, 1, 1], [], []>} : vector<2x64xf32>, vector<64x256xf32>, vector<2x256xf32> -> vector<2x256xf32>
    %14 = arith.addf %12, %13 : vector<2x256xf32>
    %15 = arith.negf %14 : vector<2x256xf32>
    %16 = math.exp %15 : vector<2x256xf32>
    %cst_13 = arith.constant 1.000000e+00 : f32
    %17 = vector.broadcast %cst_13 : f32 to vector<2x256xf32>
    %18 = arith.addf %17, %16 : vector<2x256xf32>
    %19 = arith.divf %17, %18 : vector<2x256xf32>
    %20 = vector.extract_strided_slice %19 {offsets = [0, 0], sizes = [2, 64], strides = [1, 1]} : vector<2x256xf32> to vector<2x64xf32>
    %21 = vector.extract_strided_slice %19 {offsets = [0, 64], sizes = [2, 64], strides = [1, 1]} : vector<2x256xf32> to vector<2x64xf32>
    %22 = vector.extract_strided_slice %19 {offsets = [0, 128], sizes = [2, 64], strides = [1, 1]} : vector<2x256xf32> to vector<2x64xf32>
    %23 = vector.extract_strided_slice %19 {offsets = [0, 192], sizes = [2, 64], strides = [1, 1]} : vector<2x256xf32> to vector<2x64xf32>
    %cst_14 = arith.constant 2.000000e+00 : f32
    %24 = vector.broadcast %cst_14 : f32 to vector<2x64xf32>
    %25 = arith.mulf %24, %23 : vector<2x64xf32>
    %cst_15 = arith.constant 1.000000e+00 : f32
    %26 = vector.broadcast %cst_15 : f32 to vector<2x64xf32>
    %27 = arith.subf %25, %26 : vector<2x64xf32>
    %28 = arith.mulf %21, %11 : vector<2x64xf32>
    %29 = arith.mulf %20, %27 : vector<2x64xf32>
    %30 = arith.addf %28, %29 : vector<2x64xf32>
    %31 = math.tanh %30 : vector<2x64xf32>
    %32 = arith.mulf %22, %31 : vector<2x64xf32>
    %33 = tpu.concatenate %32, %11 in 1 : vector<2x64xf32>, vector<2x64xf32> -> vector<2x128xf32>
    %cst_16 = arith.constant dense<0.000000e+00> : vector<2x256xf32>
    %34 = tpu.matmul %33, %7, %cst_16 {dimension_numbers = #tpu.dot_dimension_numbers<[1], [0], [0], [1], [0, 0, 1, 1], [], []>} : vector<2x128xf32>, vector<128x256xf32>, vector<2x256xf32> -> vector<2x256xf32>
    %35 = arith.addf %34, %10 : vector<2x256xf32>
    %36 = arith.negf %35 : vector<2x256xf32>
    %37 = math.exp %36 : vector<2x256xf32>
    %cst_17 = arith.constant 1.000000e+00 : f32
    %38 = vector.broadcast %cst_17 : f32 to vector<2x256xf32>
    %39 = arith.addf %38, %37 : vector<2x256xf32>
    %40 = arith.divf %38, %39 : vector<2x256xf32>
    %41 = vector.extract_strided_slice %40 {offsets = [0, 0], sizes = [2, 64], strides = [1, 1]} : vector<2x256xf32> to vector<2x64xf32>
    %42 = vector.extract_strided_slice %40 {offsets = [0, 64], sizes = [2, 64], strides = [1, 1]} : vector<2x256xf32> to vector<2x64xf32>
    %43 = vector.extract_strided_slice %40 {offsets = [0, 128], sizes = [2, 64], strides = [1, 1]} : vector<2x256xf32> to vector<2x64xf32>
    %44 = vector.extract_strided_slice %40 {offsets = [0, 192], sizes = [2, 64], strides = [1, 1]} : vector<2x256xf32> to vector<2x64xf32>
    %cst_18 = arith.constant 2.000000e+00 : f32
    %45 = vector.broadcast %cst_18 : f32 to vector<2x64xf32>
    %46 = arith.mulf %45, %44 : vector<2x64xf32>
    %cst_19 = arith.constant 1.000000e+00 : f32
    %47 = vector.broadcast %cst_19 : f32 to vector<2x64xf32>
    %48 = arith.subf %46, %47 : vector<2x64xf32>
    %49 = arith.mulf %42, %11 : vector<2x64xf32>
    %50 = arith.mulf %41, %48 : vector<2x64xf32>
    %51 = arith.addf %49, %50 : vector<2x64xf32>
    %52 = math.tanh %51 : vector<2x64xf32>
    %53 = arith.mulf %43, %52 : vector<2x64xf32>
    %54 = vector.extract_strided_slice %5 {offsets = [2, 0], sizes = [2, 256], strides = [1, 1]} : vector<16x256xf32> to vector<2x256xf32>
    %cst_20 = arith.constant dense<0.000000e+00> : vector<2x256xf32>
    %55 = tpu.matmul %32, %6, %cst_20 {dimension_numbers = #tpu.dot_dimension_numbers<[1], [0], [0], [1], [0, 0, 1, 1], [], []>} : vector<2x64xf32>, vector<64x256xf32>, vector<2x256xf32> -> vector<2x256xf32>
    %56 = arith.addf %54, %55 : vector<2x256xf32>
    %57 = arith.negf %56 : vector<2x256xf32>
    %58 = math.exp %57 : vector<2x256xf32>
    %cst_21 = arith.constant 1.000000e+00 : f32
    %59 = vector.broadcast %cst_21 : f32 to vector<2x256xf32>
    %60 = arith.addf %59, %58 : vector<2x256xf32>
    %61 = arith.divf %59, %60 : vector<2x256xf32>
    %62 = vector.extract_strided_slice %61 {offsets = [0, 0], sizes = [2, 64], strides = [1, 1]} : vector<2x256xf32> to vector<2x64xf32>
    %63 = vector.extract_strided_slice %61 {offsets = [0, 64], sizes = [2, 64], strides = [1, 1]} : vector<2x256xf32> to vector<2x64xf32>
    %64 = vector.extract_strided_slice %61 {offsets = [0, 128], sizes = [2, 64], strides = [1, 1]} : vector<2x256xf32> to vector<2x64xf32>
    %65 = vector.extract_strided_slice %61 {offsets = [0, 192], sizes = [2, 64], strides = [1, 1]} : vector<2x256xf32> to vector<2x64xf32>
    %cst_22 = arith.constant 2.000000e+00 : f32
    %66 = vector.broadcast %cst_22 : f32 to vector<2x64xf32>
    %67 = arith.mulf %66, %65 : vector<2x64xf32>
    %cst_23 = arith.constant 1.000000e+00 : f32
    %68 = vector.broadcast %cst_23 : f32 to vector<2x64xf32>
    %69 = arith.subf %67, %68 : vector<2x64xf32>
    %70 = arith.mulf %63, %30 : vector<2x64xf32>
    %71 = arith.mulf %62, %69 : vector<2x64xf32>
    %72 = arith.addf %70, %71 : vector<2x64xf32>
    %73 = math.tanh %72 : vector<2x64xf32>
    %74 = arith.mulf %64, %73 : vector<2x64xf32>
    %75 = tpu.concatenate %74, %53 in 1 : vector<2x64xf32>, vector<2x64xf32> -> vector<2x128xf32>
    %cst_24 = arith.constant dense<0.000000e+00> : vector<2x256xf32>
    %76 = tpu.matmul %75, %7, %cst_24 {dimension_numbers = #tpu.dot_dimension_numbers<[1], [0], [0], [1], [0, 0, 1, 1], [], []>} : vector<2x128xf32>, vector<128x256xf32>, vector<2x256xf32> -> vector<2x256xf32>
    %77 = arith.addf %76, %10 : vector<2x256xf32>
    %78 = arith.negf %77 : vector<2x256xf32>
    %79 = math.exp %78 : vector<2x256xf32>
    %cst_25 = arith.constant 1.000000e+00 : f32
    %80 = vector.broadcast %cst_25 : f32 to vector<2x256xf32>
    %81 = arith.addf %80, %79 : vector<2x256xf32>
    %82 = arith.divf %80, %81 : vector<2x256xf32>
    %83 = vector.extract_strided_slice %82 {offsets = [0, 0], sizes = [2, 64], strides = [1, 1]} : vector<2x256xf32> to vector<2x64xf32>
    %84 = vector.extract_strided_slice %82 {offsets = [0, 64], sizes = [2, 64], strides = [1, 1]} : vector<2x256xf32> to vector<2x64xf32>
    %85 = vector.extract_strided_slice %82 {offsets = [0, 128], sizes = [2, 64], strides = [1, 1]} : vector<2x256xf32> to vector<2x64xf32>
    %86 = vector.extract_strided_slice %82 {offsets = [0, 192], sizes = [2, 64], strides = [1, 1]} : vector<2x256xf32> to vector<2x64xf32>
    %cst_26 = arith.constant 2.000000e+00 : f32
    %87 = vector.broadcast %cst_26 : f32 to vector<2x64xf32>
    %88 = arith.mulf %87, %86 : vector<2x64xf32>
    %cst_27 = arith.constant 1.000000e+00 : f32
    %89 = vector.broadcast %cst_27 : f32 to vector<2x64xf32>
    %90 = arith.subf %88, %89 : vector<2x64xf32>
    %91 = arith.mulf %84, %51 : vector<2x64xf32>
    %92 = arith.mulf %83, %90 : vector<2x64xf32>
    %93 = arith.addf %91, %92 : vector<2x64xf32>
    %94 = math.tanh %93 : vector<2x64xf32>
    %95 = arith.mulf %85, %94 : vector<2x64xf32>
    %96 = vector.extract_strided_slice %5 {offsets = [4, 0], sizes = [2, 256], strides = [1, 1]} : vector<16x256xf32> to vector<2x256xf32>
    %cst_28 = arith.constant dense<0.000000e+00> : vector<2x256xf32>
    %97 = tpu.matmul %74, %6, %cst_28 {dimension_numbers = #tpu.dot_dimension_numbers<[1], [0], [0], [1], [0, 0, 1, 1], [], []>} : vector<2x64xf32>, vector<64x256xf32>, vector<2x256xf32> -> vector<2x256xf32>
    %98 = arith.addf %96, %97 : vector<2x256xf32>
    %99 = arith.negf %98 : vector<2x256xf32>
    %100 = math.exp %99 : vector<2x256xf32>
    %cst_29 = arith.constant 1.000000e+00 : f32
    %101 = vector.broadcast %cst_29 : f32 to vector<2x256xf32>
    %102 = arith.addf %101, %100 : vector<2x256xf32>
    %103 = arith.divf %101, %102 : vector<2x256xf32>
    %104 = vector.extract_strided_slice %103 {offsets = [0, 0], sizes = [2, 64], strides = [1, 1]} : vector<2x256xf32> to vector<2x64xf32>
    %105 = vector.extract_strided_slice %103 {offsets = [0, 64], sizes = [2, 64], strides = [1, 1]} : vector<2x256xf32> to vector<2x64xf32>
    %106 = vector.extract_strided_slice %103 {offsets = [0, 128], sizes = [2, 64], strides = [1, 1]} : vector<2x256xf32> to vector<2x64xf32>
    %107 = vector.extract_strided_slice %103 {offsets = [0, 192], sizes = [2, 64], strides = [1, 1]} : vector<2x256xf32> to vector<2x64xf32>
    %cst_30 = arith.constant 2.000000e+00 : f32
    %108 = vector.broadcast %cst_30 : f32 to vector<2x64xf32>
    %109 = arith.mulf %108, %107 : vector<2x64xf32>
    %cst_31 = arith.constant 1.000000e+00 : f32
    %110 = vector.broadcast %cst_31 : f32 to vector<2x64xf32>
    %111 = arith.subf %109, %110 : vector<2x64xf32>
    %112 = arith.mulf %105, %72 : vector<2x64xf32>
    %113 = arith.mulf %104, %111 : vector<2x64xf32>
    %114 = arith.addf %112, %113 : vector<2x64xf32>
    %115 = math.tanh %114 : vector<2x64xf32>
    %116 = arith.mulf %106, %115 : vector<2x64xf32>
    %117 = tpu.concatenate %116, %95 in 1 : vector<2x64xf32>, vector<2x64xf32> -> vector<2x128xf32>
    %cst_32 = arith.constant dense<0.000000e+00> : vector<2x256xf32>
    %118 = tpu.matmul %117, %7, %cst_32 {dimension_numbers = #tpu.dot_dimension_numbers<[1], [0], [0], [1], [0, 0, 1, 1], [], []>} : vector<2x128xf32>, vector<128x256xf32>, vector<2x256xf32> -> vector<2x256xf32>
    %119 = arith.addf %118, %10 : vector<2x256xf32>
    %120 = arith.negf %119 : vector<2x256xf32>
    %121 = math.exp %120 : vector<2x256xf32>
    %cst_33 = arith.constant 1.000000e+00 : f32
    %122 = vector.broadcast %cst_33 : f32 to vector<2x256xf32>
    %123 = arith.addf %122, %121 : vector<2x256xf32>
    %124 = arith.divf %122, %123 : vector<2x256xf32>
    %125 = vector.extract_strided_slice %124 {offsets = [0, 0], sizes = [2, 64], strides = [1, 1]} : vector<2x256xf32> to vector<2x64xf32>
    %126 = vector.extract_strided_slice %124 {offsets = [0, 64], sizes = [2, 64], strides = [1, 1]} : vector<2x256xf32> to vector<2x64xf32>
    %127 = vector.extract_strided_slice %124 {offsets = [0, 128], sizes = [2, 64], strides = [1, 1]} : vector<2x256xf32> to vector<2x64xf32>
    %128 = vector.extract_strided_slice %124 {offsets = [0, 192], sizes = [2, 64], strides = [1, 1]} : vector<2x256xf32> to vector<2x64xf32>
    %cst_34 = arith.constant 2.000000e+00 : f32
    %129 = vector.broadcast %cst_34 : f32 to vector<2x64xf32>
    %130 = arith.mulf %129, %128 : vector<2x64xf32>
    %cst_35 = arith.constant 1.000000e+00 : f32
    %131 = vector.broadcast %cst_35 : f32 to vector<2x64xf32>
    %132 = arith.subf %130, %131 : vector<2x64xf32>
    %133 = arith.mulf %126, %93 : vector<2x64xf32>
    %134 = arith.mulf %125, %132 : vector<2x64xf32>
    %135 = arith.addf %133, %134 : vector<2x64xf32>
    %136 = math.tanh %135 : vector<2x64xf32>
    %137 = arith.mulf %127, %136 : vector<2x64xf32>
    %138 = vector.extract_strided_slice %5 {offsets = [6, 0], sizes = [2, 256], strides = [1, 1]} : vector<16x256xf32> to vector<2x256xf32>
    %cst_36 = arith.constant dense<0.000000e+00> : vector<2x256xf32>
    %139 = tpu.matmul %116, %6, %cst_36 {dimension_numbers = #tpu.dot_dimension_numbers<[1], [0], [0], [1], [0, 0, 1, 1], [], []>} : vector<2x64xf32>, vector<64x256xf32>, vector<2x256xf32> -> vector<2x256xf32>
    %140 = arith.addf %138, %139 : vector<2x256xf32>
    %141 = arith.negf %140 : vector<2x256xf32>
    %142 = math.exp %141 : vector<2x256xf32>
    %cst_37 = arith.constant 1.000000e+00 : f32
    %143 = vector.broadcast %cst_37 : f32 to vector<2x256xf32>
    %144 = arith.addf %143, %142 : vector<2x256xf32>
    %145 = arith.divf %143, %144 : vector<2x256xf32>
    %146 = vector.extract_strided_slice %145 {offsets = [0, 0], sizes = [2, 64], strides = [1, 1]} : vector<2x256xf32> to vector<2x64xf32>
    %147 = vector.extract_strided_slice %145 {offsets = [0, 64], sizes = [2, 64], strides = [1, 1]} : vector<2x256xf32> to vector<2x64xf32>
    %148 = vector.extract_strided_slice %145 {offsets = [0, 128], sizes = [2, 64], strides = [1, 1]} : vector<2x256xf32> to vector<2x64xf32>
    %149 = vector.extract_strided_slice %145 {offsets = [0, 192], sizes = [2, 64], strides = [1, 1]} : vector<2x256xf32> to vector<2x64xf32>
    %cst_38 = arith.constant 2.000000e+00 : f32
    %150 = vector.broadcast %cst_38 : f32 to vector<2x64xf32>
    %151 = arith.mulf %150, %149 : vector<2x64xf32>
    %cst_39 = arith.constant 1.000000e+00 : f32
    %152 = vector.broadcast %cst_39 : f32 to vector<2x64xf32>
    %153 = arith.subf %151, %152 : vector<2x64xf32>
    %154 = arith.mulf %147, %114 : vector<2x64xf32>
    %155 = arith.mulf %146, %153 : vector<2x64xf32>
    %156 = arith.addf %154, %155 : vector<2x64xf32>
    %157 = math.tanh %156 : vector<2x64xf32>
    %158 = arith.mulf %148, %157 : vector<2x64xf32>
    %159 = tpu.concatenate %158, %137 in 1 : vector<2x64xf32>, vector<2x64xf32> -> vector<2x128xf32>
    %cst_40 = arith.constant dense<0.000000e+00> : vector<2x256xf32>
    %160 = tpu.matmul %159, %7, %cst_40 {dimension_numbers = #tpu.dot_dimension_numbers<[1], [0], [0], [1], [0, 0, 1, 1], [], []>} : vector<2x128xf32>, vector<128x256xf32>, vector<2x256xf32> -> vector<2x256xf32>
    %161 = arith.addf %160, %10 : vector<2x256xf32>
    %162 = arith.negf %161 : vector<2x256xf32>
    %163 = math.exp %162 : vector<2x256xf32>
    %cst_41 = arith.constant 1.000000e+00 : f32
    %164 = vector.broadcast %cst_41 : f32 to vector<2x256xf32>
    %165 = arith.addf %164, %163 : vector<2x256xf32>
    %166 = arith.divf %164, %165 : vector<2x256xf32>
    %167 = vector.extract_strided_slice %166 {offsets = [0, 0], sizes = [2, 64], strides = [1, 1]} : vector<2x256xf32> to vector<2x64xf32>
    %168 = vector.extract_strided_slice %166 {offsets = [0, 64], sizes = [2, 64], strides = [1, 1]} : vector<2x256xf32> to vector<2x64xf32>
    %169 = vector.extract_strided_slice %166 {offsets = [0, 128], sizes = [2, 64], strides = [1, 1]} : vector<2x256xf32> to vector<2x64xf32>
    %170 = vector.extract_strided_slice %166 {offsets = [0, 192], sizes = [2, 64], strides = [1, 1]} : vector<2x256xf32> to vector<2x64xf32>
    %cst_42 = arith.constant 2.000000e+00 : f32
    %171 = vector.broadcast %cst_42 : f32 to vector<2x64xf32>
    %172 = arith.mulf %171, %170 : vector<2x64xf32>
    %cst_43 = arith.constant 1.000000e+00 : f32
    %173 = vector.broadcast %cst_43 : f32 to vector<2x64xf32>
    %174 = arith.subf %172, %173 : vector<2x64xf32>
    %175 = arith.mulf %168, %135 : vector<2x64xf32>
    %176 = arith.mulf %167, %174 : vector<2x64xf32>
    %177 = arith.addf %175, %176 : vector<2x64xf32>
    %178 = math.tanh %177 : vector<2x64xf32>
    %179 = arith.mulf %169, %178 : vector<2x64xf32>
    %180 = vector.extract_strided_slice %5 {offsets = [8, 0], sizes = [2, 256], strides = [1, 1]} : vector<16x256xf32> to vector<2x256xf32>
    %cst_44 = arith.constant dense<0.000000e+00> : vector<2x256xf32>
    %181 = tpu.matmul %158, %6, %cst_44 {dimension_numbers = #tpu.dot_dimension_numbers<[1], [0], [0], [1], [0, 0, 1, 1], [], []>} : vector<2x64xf32>, vector<64x256xf32>, vector<2x256xf32> -> vector<2x256xf32>
    %182 = arith.addf %180, %181 : vector<2x256xf32>
    %183 = arith.negf %182 : vector<2x256xf32>
    %184 = math.exp %183 : vector<2x256xf32>
    %cst_45 = arith.constant 1.000000e+00 : f32
    %185 = vector.broadcast %cst_45 : f32 to vector<2x256xf32>
    %186 = arith.addf %185, %184 : vector<2x256xf32>
    %187 = arith.divf %185, %186 : vector<2x256xf32>
    %188 = vector.extract_strided_slice %187 {offsets = [0, 0], sizes = [2, 64], strides = [1, 1]} : vector<2x256xf32> to vector<2x64xf32>
    %189 = vector.extract_strided_slice %187 {offsets = [0, 64], sizes = [2, 64], strides = [1, 1]} : vector<2x256xf32> to vector<2x64xf32>
    %190 = vector.extract_strided_slice %187 {offsets = [0, 128], sizes = [2, 64], strides = [1, 1]} : vector<2x256xf32> to vector<2x64xf32>
    %191 = vector.extract_strided_slice %187 {offsets = [0, 192], sizes = [2, 64], strides = [1, 1]} : vector<2x256xf32> to vector<2x64xf32>
    %cst_46 = arith.constant 2.000000e+00 : f32
    %192 = vector.broadcast %cst_46 : f32 to vector<2x64xf32>
    %193 = arith.mulf %192, %191 : vector<2x64xf32>
    %cst_47 = arith.constant 1.000000e+00 : f32
    %194 = vector.broadcast %cst_47 : f32 to vector<2x64xf32>
    %195 = arith.subf %193, %194 : vector<2x64xf32>
    %196 = arith.mulf %189, %156 : vector<2x64xf32>
    %197 = arith.mulf %188, %195 : vector<2x64xf32>
    %198 = arith.addf %196, %197 : vector<2x64xf32>
    %199 = math.tanh %198 : vector<2x64xf32>
    %200 = arith.mulf %190, %199 : vector<2x64xf32>
    %201 = tpu.concatenate %200, %179 in 1 : vector<2x64xf32>, vector<2x64xf32> -> vector<2x128xf32>
    %cst_48 = arith.constant dense<0.000000e+00> : vector<2x256xf32>
    %202 = tpu.matmul %201, %7, %cst_48 {dimension_numbers = #tpu.dot_dimension_numbers<[1], [0], [0], [1], [0, 0, 1, 1], [], []>} : vector<2x128xf32>, vector<128x256xf32>, vector<2x256xf32> -> vector<2x256xf32>
    %203 = arith.addf %202, %10 : vector<2x256xf32>
    %204 = arith.negf %203 : vector<2x256xf32>
    %205 = math.exp %204 : vector<2x256xf32>
    %cst_49 = arith.constant 1.000000e+00 : f32
    %206 = vector.broadcast %cst_49 : f32 to vector<2x256xf32>
    %207 = arith.addf %206, %205 : vector<2x256xf32>
    %208 = arith.divf %206, %207 : vector<2x256xf32>
    %209 = vector.extract_strided_slice %208 {offsets = [0, 0], sizes = [2, 64], strides = [1, 1]} : vector<2x256xf32> to vector<2x64xf32>
    %210 = vector.extract_strided_slice %208 {offsets = [0, 64], sizes = [2, 64], strides = [1, 1]} : vector<2x256xf32> to vector<2x64xf32>
    %211 = vector.extract_strided_slice %208 {offsets = [0, 128], sizes = [2, 64], strides = [1, 1]} : vector<2x256xf32> to vector<2x64xf32>
    %212 = vector.extract_strided_slice %208 {offsets = [0, 192], sizes = [2, 64], strides = [1, 1]} : vector<2x256xf32> to vector<2x64xf32>
    %cst_50 = arith.constant 2.000000e+00 : f32
    %213 = vector.broadcast %cst_50 : f32 to vector<2x64xf32>
    %214 = arith.mulf %213, %212 : vector<2x64xf32>
    %cst_51 = arith.constant 1.000000e+00 : f32
    %215 = vector.broadcast %cst_51 : f32 to vector<2x64xf32>
    %216 = arith.subf %214, %215 : vector<2x64xf32>
    %217 = arith.mulf %210, %177 : vector<2x64xf32>
    %218 = arith.mulf %209, %216 : vector<2x64xf32>
    %219 = arith.addf %217, %218 : vector<2x64xf32>
    %220 = math.tanh %219 : vector<2x64xf32>
    %221 = arith.mulf %211, %220 : vector<2x64xf32>
    %222 = vector.extract_strided_slice %5 {offsets = [10, 0], sizes = [2, 256], strides = [1, 1]} : vector<16x256xf32> to vector<2x256xf32>
    %cst_52 = arith.constant dense<0.000000e+00> : vector<2x256xf32>
    %223 = tpu.matmul %200, %6, %cst_52 {dimension_numbers = #tpu.dot_dimension_numbers<[1], [0], [0], [1], [0, 0, 1, 1], [], []>} : vector<2x64xf32>, vector<64x256xf32>, vector<2x256xf32> -> vector<2x256xf32>
    %224 = arith.addf %222, %223 : vector<2x256xf32>
    %225 = arith.negf %224 : vector<2x256xf32>
    %226 = math.exp %225 : vector<2x256xf32>
    %cst_53 = arith.constant 1.000000e+00 : f32
    %227 = vector.broadcast %cst_53 : f32 to vector<2x256xf32>
    %228 = arith.addf %227, %226 : vector<2x256xf32>
    %229 = arith.divf %227, %228 : vector<2x256xf32>
    %230 = vector.extract_strided_slice %229 {offsets = [0, 0], sizes = [2, 64], strides = [1, 1]} : vector<2x256xf32> to vector<2x64xf32>
    %231 = vector.extract_strided_slice %229 {offsets = [0, 64], sizes = [2, 64], strides = [1, 1]} : vector<2x256xf32> to vector<2x64xf32>
    %232 = vector.extract_strided_slice %229 {offsets = [0, 128], sizes = [2, 64], strides = [1, 1]} : vector<2x256xf32> to vector<2x64xf32>
    %233 = vector.extract_strided_slice %229 {offsets = [0, 192], sizes = [2, 64], strides = [1, 1]} : vector<2x256xf32> to vector<2x64xf32>
    %cst_54 = arith.constant 2.000000e+00 : f32
    %234 = vector.broadcast %cst_54 : f32 to vector<2x64xf32>
    %235 = arith.mulf %234, %233 : vector<2x64xf32>
    %cst_55 = arith.constant 1.000000e+00 : f32
    %236 = vector.broadcast %cst_55 : f32 to vector<2x64xf32>
    %237 = arith.subf %235, %236 : vector<2x64xf32>
    %238 = arith.mulf %231, %198 : vector<2x64xf32>
    %239 = arith.mulf %230, %237 : vector<2x64xf32>
    %240 = arith.addf %238, %239 : vector<2x64xf32>
    %241 = math.tanh %240 : vector<2x64xf32>
    %242 = arith.mulf %232, %241 : vector<2x64xf32>
    %243 = tpu.concatenate %242, %221 in 1 : vector<2x64xf32>, vector<2x64xf32> -> vector<2x128xf32>
    %cst_56 = arith.constant dense<0.000000e+00> : vector<2x256xf32>
    %244 = tpu.matmul %243, %7, %cst_56 {dimension_numbers = #tpu.dot_dimension_numbers<[1], [0], [0], [1], [0, 0, 1, 1], [], []>} : vector<2x128xf32>, vector<128x256xf32>, vector<2x256xf32> -> vector<2x256xf32>
    %245 = arith.addf %244, %10 : vector<2x256xf32>
    %246 = arith.negf %245 : vector<2x256xf32>
    %247 = math.exp %246 : vector<2x256xf32>
    %cst_57 = arith.constant 1.000000e+00 : f32
    %248 = vector.broadcast %cst_57 : f32 to vector<2x256xf32>
    %249 = arith.addf %248, %247 : vector<2x256xf32>
    %250 = arith.divf %248, %249 : vector<2x256xf32>
    %251 = vector.extract_strided_slice %250 {offsets = [0, 0], sizes = [2, 64], strides = [1, 1]} : vector<2x256xf32> to vector<2x64xf32>
    %252 = vector.extract_strided_slice %250 {offsets = [0, 64], sizes = [2, 64], strides = [1, 1]} : vector<2x256xf32> to vector<2x64xf32>
    %253 = vector.extract_strided_slice %250 {offsets = [0, 128], sizes = [2, 64], strides = [1, 1]} : vector<2x256xf32> to vector<2x64xf32>
    %254 = vector.extract_strided_slice %250 {offsets = [0, 192], sizes = [2, 64], strides = [1, 1]} : vector<2x256xf32> to vector<2x64xf32>
    %cst_58 = arith.constant 2.000000e+00 : f32
    %255 = vector.broadcast %cst_58 : f32 to vector<2x64xf32>
    %256 = arith.mulf %255, %254 : vector<2x64xf32>
    %cst_59 = arith.constant 1.000000e+00 : f32
    %257 = vector.broadcast %cst_59 : f32 to vector<2x64xf32>
    %258 = arith.subf %256, %257 : vector<2x64xf32>
    %259 = arith.mulf %252, %219 : vector<2x64xf32>
    %260 = arith.mulf %251, %258 : vector<2x64xf32>
    %261 = arith.addf %259, %260 : vector<2x64xf32>
    %262 = math.tanh %261 : vector<2x64xf32>
    %263 = arith.mulf %253, %262 : vector<2x64xf32>
    %264 = vector.extract_strided_slice %5 {offsets = [12, 0], sizes = [2, 256], strides = [1, 1]} : vector<16x256xf32> to vector<2x256xf32>
    %cst_60 = arith.constant dense<0.000000e+00> : vector<2x256xf32>
    %265 = tpu.matmul %242, %6, %cst_60 {dimension_numbers = #tpu.dot_dimension_numbers<[1], [0], [0], [1], [0, 0, 1, 1], [], []>} : vector<2x64xf32>, vector<64x256xf32>, vector<2x256xf32> -> vector<2x256xf32>
    %266 = arith.addf %264, %265 : vector<2x256xf32>
    %267 = arith.negf %266 : vector<2x256xf32>
    %268 = math.exp %267 : vector<2x256xf32>
    %cst_61 = arith.constant 1.000000e+00 : f32
    %269 = vector.broadcast %cst_61 : f32 to vector<2x256xf32>
    %270 = arith.addf %269, %268 : vector<2x256xf32>
    %271 = arith.divf %269, %270 : vector<2x256xf32>
    %272 = vector.extract_strided_slice %271 {offsets = [0, 0], sizes = [2, 64], strides = [1, 1]} : vector<2x256xf32> to vector<2x64xf32>
    %273 = vector.extract_strided_slice %271 {offsets = [0, 64], sizes = [2, 64], strides = [1, 1]} : vector<2x256xf32> to vector<2x64xf32>
    %274 = vector.extract_strided_slice %271 {offsets = [0, 128], sizes = [2, 64], strides = [1, 1]} : vector<2x256xf32> to vector<2x64xf32>
    %275 = vector.extract_strided_slice %271 {offsets = [0, 192], sizes = [2, 64], strides = [1, 1]} : vector<2x256xf32> to vector<2x64xf32>
    %cst_62 = arith.constant 2.000000e+00 : f32
    %276 = vector.broadcast %cst_62 : f32 to vector<2x64xf32>
    %277 = arith.mulf %276, %275 : vector<2x64xf32>
    %cst_63 = arith.constant 1.000000e+00 : f32
    %278 = vector.broadcast %cst_63 : f32 to vector<2x64xf32>
    %279 = arith.subf %277, %278 : vector<2x64xf32>
    %280 = arith.mulf %273, %240 : vector<2x64xf32>
    %281 = arith.mulf %272, %279 : vector<2x64xf32>
    %282 = arith.addf %280, %281 : vector<2x64xf32>
    %283 = math.tanh %282 : vector<2x64xf32>
    %284 = arith.mulf %274, %283 : vector<2x64xf32>
    %285 = tpu.concatenate %284, %263 in 1 : vector<2x64xf32>, vector<2x64xf32> -> vector<2x128xf32>
    %cst_64 = arith.constant dense<0.000000e+00> : vector<2x256xf32>
    %286 = tpu.matmul %285, %7, %cst_64 {dimension_numbers = #tpu.dot_dimension_numbers<[1], [0], [0], [1], [0, 0, 1, 1], [], []>} : vector<2x128xf32>, vector<128x256xf32>, vector<2x256xf32> -> vector<2x256xf32>
    %287 = arith.addf %286, %10 : vector<2x256xf32>
    %288 = arith.negf %287 : vector<2x256xf32>
    %289 = math.exp %288 : vector<2x256xf32>
    %cst_65 = arith.constant 1.000000e+00 : f32
    %290 = vector.broadcast %cst_65 : f32 to vector<2x256xf32>
    %291 = arith.addf %290, %289 : vector<2x256xf32>
    %292 = arith.divf %290, %291 : vector<2x256xf32>
    %293 = vector.extract_strided_slice %292 {offsets = [0, 0], sizes = [2, 64], strides = [1, 1]} : vector<2x256xf32> to vector<2x64xf32>
    %294 = vector.extract_strided_slice %292 {offsets = [0, 64], sizes = [2, 64], strides = [1, 1]} : vector<2x256xf32> to vector<2x64xf32>
    %295 = vector.extract_strided_slice %292 {offsets = [0, 128], sizes = [2, 64], strides = [1, 1]} : vector<2x256xf32> to vector<2x64xf32>
    %296 = vector.extract_strided_slice %292 {offsets = [0, 192], sizes = [2, 64], strides = [1, 1]} : vector<2x256xf32> to vector<2x64xf32>
    %cst_66 = arith.constant 2.000000e+00 : f32
    %297 = vector.broadcast %cst_66 : f32 to vector<2x64xf32>
    %298 = arith.mulf %297, %296 : vector<2x64xf32>
    %cst_67 = arith.constant 1.000000e+00 : f32
    %299 = vector.broadcast %cst_67 : f32 to vector<2x64xf32>
    %300 = arith.subf %298, %299 : vector<2x64xf32>
    %301 = arith.mulf %294, %261 : vector<2x64xf32>
    %302 = arith.mulf %293, %300 : vector<2x64xf32>
    %303 = arith.addf %301, %302 : vector<2x64xf32>
    %304 = math.tanh %303 : vector<2x64xf32>
    %305 = arith.mulf %295, %304 : vector<2x64xf32>
    %306 = vector.extract_strided_slice %5 {offsets = [14, 0], sizes = [2, 256], strides = [1, 1]} : vector<16x256xf32> to vector<2x256xf32>
    %cst_68 = arith.constant dense<0.000000e+00> : vector<2x256xf32>
    %307 = tpu.matmul %284, %6, %cst_68 {dimension_numbers = #tpu.dot_dimension_numbers<[1], [0], [0], [1], [0, 0, 1, 1], [], []>} : vector<2x64xf32>, vector<64x256xf32>, vector<2x256xf32> -> vector<2x256xf32>
    %308 = arith.addf %306, %307 : vector<2x256xf32>
    %309 = arith.negf %308 : vector<2x256xf32>
    %310 = math.exp %309 : vector<2x256xf32>
    %cst_69 = arith.constant 1.000000e+00 : f32
    %311 = vector.broadcast %cst_69 : f32 to vector<2x256xf32>
    %312 = arith.addf %311, %310 : vector<2x256xf32>
    %313 = arith.divf %311, %312 : vector<2x256xf32>
    %314 = vector.extract_strided_slice %313 {offsets = [0, 0], sizes = [2, 64], strides = [1, 1]} : vector<2x256xf32> to vector<2x64xf32>
    %315 = vector.extract_strided_slice %313 {offsets = [0, 64], sizes = [2, 64], strides = [1, 1]} : vector<2x256xf32> to vector<2x64xf32>
    %316 = vector.extract_strided_slice %313 {offsets = [0, 128], sizes = [2, 64], strides = [1, 1]} : vector<2x256xf32> to vector<2x64xf32>
    %317 = vector.extract_strided_slice %313 {offsets = [0, 192], sizes = [2, 64], strides = [1, 1]} : vector<2x256xf32> to vector<2x64xf32>
    %cst_70 = arith.constant 2.000000e+00 : f32
    %318 = vector.broadcast %cst_70 : f32 to vector<2x64xf32>
    %319 = arith.mulf %318, %317 : vector<2x64xf32>
    %cst_71 = arith.constant 1.000000e+00 : f32
    %320 = vector.broadcast %cst_71 : f32 to vector<2x64xf32>
    %321 = arith.subf %319, %320 : vector<2x64xf32>
    %322 = arith.mulf %315, %282 : vector<2x64xf32>
    %323 = arith.mulf %314, %321 : vector<2x64xf32>
    %324 = arith.addf %322, %323 : vector<2x64xf32>
    %325 = math.tanh %324 : vector<2x64xf32>
    %326 = arith.mulf %316, %325 : vector<2x64xf32>
    %327 = tpu.concatenate %326, %305 in 1 : vector<2x64xf32>, vector<2x64xf32> -> vector<2x128xf32>
    %cst_72 = arith.constant dense<0.000000e+00> : vector<2x256xf32>
    %328 = tpu.matmul %327, %7, %cst_72 {dimension_numbers = #tpu.dot_dimension_numbers<[1], [0], [0], [1], [0, 0, 1, 1], [], []>} : vector<2x128xf32>, vector<128x256xf32>, vector<2x256xf32> -> vector<2x256xf32>
    %329 = arith.addf %328, %10 : vector<2x256xf32>
    %330 = arith.negf %329 : vector<2x256xf32>
    %331 = math.exp %330 : vector<2x256xf32>
    %cst_73 = arith.constant 1.000000e+00 : f32
    %332 = vector.broadcast %cst_73 : f32 to vector<2x256xf32>
    %333 = arith.addf %332, %331 : vector<2x256xf32>
    %334 = arith.divf %332, %333 : vector<2x256xf32>
    %335 = vector.extract_strided_slice %334 {offsets = [0, 0], sizes = [2, 64], strides = [1, 1]} : vector<2x256xf32> to vector<2x64xf32>
    %336 = vector.extract_strided_slice %334 {offsets = [0, 64], sizes = [2, 64], strides = [1, 1]} : vector<2x256xf32> to vector<2x64xf32>
    %337 = vector.extract_strided_slice %334 {offsets = [0, 128], sizes = [2, 64], strides = [1, 1]} : vector<2x256xf32> to vector<2x64xf32>
    %338 = vector.extract_strided_slice %334 {offsets = [0, 192], sizes = [2, 64], strides = [1, 1]} : vector<2x256xf32> to vector<2x64xf32>
    %cst_74 = arith.constant 2.000000e+00 : f32
    %339 = vector.broadcast %cst_74 : f32 to vector<2x64xf32>
    %340 = arith.mulf %339, %338 : vector<2x64xf32>
    %cst_75 = arith.constant 1.000000e+00 : f32
    %341 = vector.broadcast %cst_75 : f32 to vector<2x64xf32>
    %342 = arith.subf %340, %341 : vector<2x64xf32>
    %343 = arith.mulf %336, %303 : vector<2x64xf32>
    %344 = arith.mulf %335, %342 : vector<2x64xf32>
    %345 = arith.addf %343, %344 : vector<2x64xf32>
    %346 = math.tanh %345 : vector<2x64xf32>
    %347 = arith.mulf %337, %346 : vector<2x64xf32>
    %348 = tpu.concatenate %53, %95, %137, %179, %221, %263, %305, %347 in 0 : vector<2x64xf32>, vector<2x64xf32>, vector<2x64xf32>, vector<2x64xf32>, vector<2x64xf32>, vector<2x64xf32>, vector<2x64xf32>, vector<2x64xf32> -> vector<16x64xf32>
    %c0_76 = arith.constant 0 : index
    %c0_77 = arith.constant 0 : index
    %349 = vector.load %arg6[%c0_76, %c0_77] : memref<64x32xf32, #tpu.memory_space<vmem>>, vector<64x32xf32>
    %cst_78 = arith.constant dense<0.000000e+00> : vector<16x32xf32>
    %350 = tpu.matmul %348, %349, %cst_78 {dimension_numbers = #tpu.dot_dimension_numbers<[1], [0], [0], [1], [0, 0, 1, 1], [], []>} : vector<16x64xf32>, vector<64x32xf32>, vector<16x32xf32> -> vector<16x32xf32>
    %c0_79 = arith.constant 0 : index
    %c0_80 = arith.constant 0 : index
    %351 = vector.load %arg7[%c0_79, %c0_80] : memref<1x32xf32, #tpu.memory_space<vmem>>, vector<1x32xf32>
    %352 = vector.broadcast %351 : vector<1x32xf32> to vector<16x32xf32>
    %353 = arith.addf %350, %352 : vector<16x32xf32>
    %cst_81 = arith.constant 0.000000e+00 : f32
    %354 = vector.broadcast %cst_81 : f32 to vector<16x32xf32>
    %355 = arith.cmpf ogt, %353, %354 : vector<16x32xf32>
    %cst_82 = arith.constant 0.00999999977 : f32
    %356 = vector.broadcast %cst_82 : f32 to vector<16x32xf32>
    %357 = arith.mulf %356, %353 : vector<16x32xf32>
    %358 = arith.select %355, %353, %357 : vector<16x32xi1>, vector<16x32xf32>
    %c0_83 = arith.constant 0 : index
    %c0_84 = arith.constant 0 : index
    %359 = vector.load %arg8[%c0_83, %c0_84] : memref<1x32xf32, #tpu.memory_space<vmem>>, vector<1x32xf32>
    %360 = vector.broadcast %359 : vector<1x32xf32> to vector<16x32xf32>
    %361 = arith.mulf %358, %360 : vector<16x32xf32>
    %cst_85 = arith.constant dense<0.000000e+00> : vector<16xf32>
    %362 = vector.multi_reduction <add>, %361, %cst_85 [1] : vector<16x32xf32> to vector<16xf32>
    %363 = vector.shape_cast %362 : vector<16xf32> to vector<16x1xf32>
    %c0_86 = arith.constant 0 : index
    %c0_87 = arith.constant 0 : index
    %364 = vector.load %arg9[%c0_86, %c0_87] : memref<1x1xf32, #tpu.memory_space<vmem>>, vector<1x1xf32>
    %365 = vector.broadcast %364 : vector<1x1xf32> to vector<16x1xf32>
    %366 = arith.addf %363, %365 : vector<16x1xf32>
    %367 = arith.negf %366 : vector<16x1xf32>
    %368 = math.exp %367 : vector<16x1xf32>
    %cst_88 = arith.constant 1.000000e+00 : f32
    %369 = vector.broadcast %cst_88 : f32 to vector<16x1xf32>
    %370 = arith.addf %369, %368 : vector<16x1xf32>
    %371 = arith.divf %369, %370 : vector<16x1xf32>
    %c0_89 = arith.constant 0 : index
    %c0_90 = arith.constant 0 : index
    %372 = vector.load %arg10[%c0_89, %c0_90] : memref<16x1xf32, #tpu.memory_space<vmem>>, vector<16x1xf32>
    tpu.vector_store %arg10[%c0_89, %c0_90], %371 {strides = array<i32>} : memref<16x1xf32, #tpu.memory_space<vmem>>, vector<16x1xf32>,
    return
  }
}

</mosaic_0001>

<llo_original>
// kernel: tpu_custom_call.1
$region0: #{tpu_custom_call.1}
  #allocation0 [shape = 'u32[]', space=smem, size = 0x4, offset = 0x4, fixed_abs, tag = 'smem constant byte address 0x4 - core index']
  #allocation1 [shape = 'u32[144,128]{1,0:T(1,128)}', space=vmem, size = 0x12000, scoped, tag = 'internal scratch']
  #allocation2 [shape = 'f32[1,1]{1,0:T(1,128)S(1)}', space=vmem, size = 0x200, scoped, tag = 'scoped memory for tpu_custom_call.1']
  %s0 = inlined_call_operand.vmem [shape: f32[16,40], index: 0, kind: input, shape index: {}]
  %s1 = inlined_call_operand.vmem [shape: f32[40,256], index: 1, kind: input, shape index: {}]
  %s2 = inlined_call_operand.hbm [shape: f32[64,256], index: 2, kind: input, shape index: {}]
  %s3 = inlined_call_operand.vmem [shape: f32[1,256], index: 3, kind: input, shape index: {}]
  %s4 = inlined_call_operand.hbm [shape: f32[128,256], index: 4, kind: input, shape index: {}]
  %s5 = inlined_call_operand.vmem [shape: f32[1,256], index: 5, kind: input, shape index: {}]
  %s6 = inlined_call_operand.vmem [shape: f32[64,32], index: 6, kind: input, shape index: {}]
  %s7 = inlined_call_operand.vmem [shape: f32[1,32], index: 7, kind: input, shape index: {}]
  %s8 = inlined_call_operand.vmem [shape: f32[1,32], index: 8, kind: input, shape index: {}]
  %s9 = inlined_call_operand.<no memory space> [shape: f32[1,1], index: 9, kind: input, shape index: {}]
  %s10 = inlined_call_operand.vmem [shape: f32[16,1], index: 10, kind: output, shape index: {}]
  %s11 = sld [smem:[#allocation0]]
  $region58: #{tpu_custom_call.1} parent=0
    _
  %s13 = ssub.s32 1, %s11
  %s14 = scalar_select 0, %s13, %s11
  %v15 = vstv %s9
  %16 = vst [vmem:[#allocation2] sm:$0x1] %v15
  $region1: #{tpu_custom_call.1} parent=0
    #allocation3 [shape = 'u8[65536]{0}', space=vmem, size = 0x10000, scoped, tag = 'input window, operand 2, single buffered']
    #allocation4 [shape = 's32[1]{0}', space=sflag, size = 0x4, scoped, tag = 'scoped memory for tpu_custom_call.1']
    #allocation5 [shape = 'u8[131072]{0}', space=vmem, size = 0x20000, scoped, tag = 'input window, operand 4, single buffered']
    #allocation6 [shape = 's32[1]{0}', space=sflag, size = 0x4, scoped, tag = 'scoped memory for tpu_custom_call.1']
    %17 = vsyncpa [#allocation4], 0
    %18 = vsyncpa [#allocation6], 0
    // Predicated region
    $region2: #{tpu_custom_call.1} parent=1 // pred_check
      _
    $region3: #{tpu_custom_call.1} parent=1 // pred_check_branch
      %20 = sbr.rel (0) target = $region5
    $region4: #{tpu_custom_call.1} parent=1 // pred_region
      _
    $region5: #{tpu_custom_call.1} parent=1 // pred_fallthru
      _
    // Predicated region
    $region6: #{tpu_custom_call.1} parent=1 // pred_check
      _
    $region7: #{tpu_custom_call.1} parent=1 // pred_check_branch
      %22 = sbr.rel (0) target = $region9
    $region8: #{tpu_custom_call.1} parent=1 // pred_region
      _
    $region9: #{tpu_custom_call.1} parent=1 // pred_fallthru
      _
    // Predicated region
    $region10: #{tpu_custom_call.1} parent=1 // pred_check
      _
    $region11: #{tpu_custom_call.1} parent=1 // pred_check_branch
      %24 = sbr.rel (0) target = $region13
    $region12: #{tpu_custom_call.1} parent=1 // pred_region
      %s26 = ssub.s32 2048, 2048
      %27 = vsyncadd [#allocation4], %s26
      %s28 = sshll.u32 [#allocation3], 4
      %s29 = int_to_ptr.vmem [resolvable:$true] %s28
      %34 = dma.hbm_to_vmem [thread:$0]  %s2, 2048, %s29, [#allocation4], 256, 256, 16
    $region13: #{tpu_custom_call.1} parent=1 // pred_fallthru
      _
    // Predicated region
    $region14: #{tpu_custom_call.1} parent=1 // pred_check
      _
    $region15: #{tpu_custom_call.1} parent=1 // pred_check_branch
      %36 = sbr.rel (0) target = $region17
    $region16: #{tpu_custom_call.1} parent=1 // pred_region
      _
    $region17: #{tpu_custom_call.1} parent=1 // pred_fallthru
      _
    // Predicated region
    $region18: #{tpu_custom_call.1} parent=1 // pred_check
      _
    $region19: #{tpu_custom_call.1} parent=1 // pred_check_branch
      %38 = sbr.rel (0) target = $region21
    $region20: #{tpu_custom_call.1} parent=1 // pred_region
      %s40 = ssub.s32 4096, 4096
      %41 = vsyncadd [#allocation6], %s40
      %s42 = sshll.u32 [#allocation5], 4
      %s43 = int_to_ptr.vmem [resolvable:$true] %s42
      %48 = dma.hbm_to_vmem [thread:$0]  %s4, 4096, %s43, [#allocation6], 256, 256, 16
    $region21: #{tpu_custom_call.1} parent=1 // pred_fallthru
      _
    // Predicated region
    $region22: #{tpu_custom_call.1} parent=1 // pred_check
      _
    $region23: #{tpu_custom_call.1} parent=1 // pred_check_branch
      %50 = sbr.rel (0) target = $region25
    $region24: #{tpu_custom_call.1} parent=1 // pred_region
      _
    $region25: #{tpu_custom_call.1} parent=1 // pred_fallthru
      _
    // Predicated region
    $region26: #{tpu_custom_call.1} parent=1 // pred_check
      _
    $region27: #{tpu_custom_call.1} parent=1 // pred_check_branch
      %52 = sbr.rel (0) target = $region29
    $region28: #{tpu_custom_call.1} parent=1 // pred_region
      _
    $region29: #{tpu_custom_call.1} parent=1 // pred_fallthru
      _
    // Predicated region
    $region30: #{tpu_custom_call.1} parent=1 // pred_check
      _
    $region31: #{tpu_custom_call.1} parent=1 // pred_check_branch
      %54 = sbr.rel (0) target = $region33
    $region32: #{tpu_custom_call.1} parent=1 // pred_region
      _
    $region33: #{tpu_custom_call.1} parent=1 // pred_fallthru
      _
    // Predicated region
    $region34: #{tpu_custom_call.1} parent=1 // pred_check
      _
    $region35: #{tpu_custom_call.1} parent=1 // pred_check_branch
      %56 = sbr.rel (0) target = $region37
    $region36: #{tpu_custom_call.1} parent=1 // pred_region
      _
    $region37: #{tpu_custom_call.1} parent=1 // pred_fallthru
      _
    // Predicated region
    $region38: #{tpu_custom_call.1} parent=1 // pred_check
      _
    $region39: #{tpu_custom_call.1} parent=1 // pred_check_branch
      %58 = sbr.rel (0) target = $region41
    $region40: #{tpu_custom_call.1} parent=1 // pred_region
      _
    $region41: #{tpu_custom_call.1} parent=1 // pred_fallthru
      _
    // Predicated region
    $region42: #{tpu_custom_call.1} parent=1 // pred_check
      _
    $region43: #{tpu_custom_call.1} parent=1 // pred_check_branch
      %60 = sbr.rel (0) target = $region45
    $region44: #{tpu_custom_call.1} parent=1 // pred_region
      %61 = dma.done [#allocation4], 2048
    $region45: #{tpu_custom_call.1} parent=1 // pred_fallthru
      _
    // Predicated region
    $region46: #{tpu_custom_call.1} parent=1 // pred_check
      _
    $region47: #{tpu_custom_call.1} parent=1 // pred_check_branch
      %63 = sbr.rel (0) target = $region49
    $region48: #{tpu_custom_call.1} parent=1 // pred_region
      %64 = dma.done [#allocation6], 4096
    $region49: #{tpu_custom_call.1} parent=1 // pred_fallthru
      _
    %v65 = vld [vmem:[%s0] sm:$0xff]
    %v66 = vld [vmem:[%s0 + $0x8] sm:$0xff]
    %v67 = vld [vmem:[%s1] sm:$0xff]
    %v68 = vld [vmem:[%s1 + $0x8] sm:$0xff]
    %v69 = vld [vmem:[%s1 + $0x10] sm:$0xff]
    %v70 = vld [vmem:[%s1 + $0x18] sm:$0xff]
    %v71 = vld [vmem:[%s1 + $0x20] sm:$0xff]
    %v72 = vld [vmem:[%s1 + $0x28] sm:$0xff]
    %v73 = vld [vmem:[%s1 + $0x30] sm:$0xff]
    %v74 = vld [vmem:[%s1 + $0x38] sm:$0xff]
    %v75 = vld [vmem:[%s1 + $0x40] sm:$0xff]
    %v76 = vld [vmem:[%s1 + $0x48] sm:$0xff]
    %v77 = vld [vmem:[%s3] sm:$0x3]
    %v79 = vlaneseq
    %v80 = vshrl.u32 %v79, 7
    %v81 = vsub.s32 0, %v80
    %v82 = vrot.slane %v77, %v81
    %v83 = vlaneseq
    %v84 = vshrl.u32 %v83, 7
    %v85 = vsub.s32 1, %v84
    %v86 = vrot.slane %v77, %v85
    %vm89 = vcmask 326656
    %v91 = vsel %vm89, %v65, 0
    %v94 = vsel %vm89, %v66, 0
    %96 = vmatprep.subr.mxu0 0.0
    %97 = vmatpush1.msra.mxu0 0.0
    %98 = vmatprep.subr.mxu0 0.0
    %99 = vmatpush1.msra.mxu0 0.0
    %100 = vmatprep.subr.mxu0 0.0
    %101 = vmatpush1.msra.mxu0 0.0
    %102 = vmatprep.subr.mxu0 0.0
    %103 = vmatpush1.msra.mxu0 0.0
    %104 = vmatprep.subr.mxu0 0.0
    %105 = vmatpush1.msra.mxu0 0.0
    %106 = vmatprep.subr.mxu0 0.0
    %107 = vmatpush1.msra.mxu0 0.0
    %108 = vmatprep.subr.mxu0 0.0
    %109 = vmatpush1.msra.mxu0 0.0
    %110 = vmatprep.subr.mxu0 0.0
    %111 = vmatpush1.msra.mxu0 0.0
    %112 = vmatprep.subr.mxu0 0.0
    %113 = vmatpush1.msra.mxu0 0.0
    %114 = vmatprep.subr.mxu0 0.0
    %115 = vmatpush1.msra.mxu0 0.0
    %116 = vmatprep.subr.mxu0 0.0
    %117 = vmatpush1.msra.mxu0 0.0
    %118 = vmatprep.subr.mxu0 %v76
    %119 = vmatpush1.msra.mxu0 %v75
    %120 = vmatprep.subr.mxu0 %v74
    %121 = vmatpush1.msra.mxu0 %v73
    %122 = vmatprep.subr.mxu0 %v72
    %123 = vmatpush1.msra.mxu0 %v71
    %124 = vmatprep.subr.mxu0 %v70
    %125 = vmatpush1.msra.mxu0 %v69
    %126 = vmatprep.subr.mxu0 %v68
    %127 = vmatpush1.msra.mxu0 %v67
    %128 = vmatprep.subr.mxu0 0.0
    %129 = vmatpush2.msra.mxu0 0.0
    %130 = vmatprep.subr.mxu0 0.0
    %131 = vmatpush2.msra.mxu0 0.0
    %132 = vmatprep.subr.mxu0 0.0
    %133 = vmatpush2.msra.mxu0 0.0
    %134 = vmatprep.subr.mxu0 0.0
    %135 = vmatpush2.msra.mxu0 0.0
    %136 = vmatprep.subr.mxu0 0.0
    %137 = vmatpush2.msra.mxu0 0.0
    %138 = vmatprep.subr.mxu0 0.0
    %139 = vmatpush2.msra.mxu0 0.0
    %140 = vmatprep.subr.mxu0 0.0
    %141 = vmatpush2.msra.mxu0 0.0
    %142 = vmatprep.subr.mxu0 0.0
    %143 = vmatpush2.msra.mxu0 0.0
    %144 = vmatprep.subr.mxu0 0.0
    %145 = vmatpush2.msra.mxu0 0.0
    %146 = vmatprep.subr.mxu0 0.0
    %147 = vmatpush2.msra.mxu0 0.0
    %148 = vmatprep.subr.mxu0 0.0
    %149 = vmatpush2.msra.mxu0 0.0
    %150 = vmatprep.subr.mxu0 0.0
    %151 = vmatpush2.msra.mxu0 0.0
    %152 = vmatprep.subr.mxu0 0.0
    %153 = vmatpush2.msra.mxu0 0.0
    %154 = vmatprep.subr.mxu0 0.0
    %155 = vmatpush2.msra.mxu0 0.0
    %156 = vmatprep.subr.mxu0 0.0
    %157 = vmatpush2.msra.mxu0 0.0
    %158 = vmatprep.subr.mxu0 0.0
    %159 = vmatpush2.msra.mxu0 0.0
    %160 = vmatprep.mubr.f32.mxu0 0.0
    %161 = vmatmul.mubr.f32.gmra.mxu0 %v91
    %v162 = vpop.f32.mrf.mxu0
    %v163 = vadd.f32 %v82, %v162
    %v164 = vpop.f32.mrf.mxu0
    %v165 = vadd.f32 %v86, %v164
    %166 = vmatprep.mubr.f32.mxu0 0.0
    %167 = vmatmul.mubr.f32.gmra.mxu0 %v94
    %v168 = vpop.f32.mrf.mxu0
    %v169 = vadd.f32 %v82, %v168
    %v170 = vpop.f32.mrf.mxu0
    %v171 = vadd.f32 %v86, %v170
    %172 = vdwg.mxu0
    %v173 = vld [vmem:[#allocation3] sm:$0xff]
    %v174 = vld [vmem:[#allocation3 + $0x8] sm:$0xff]
    %v175 = vld [vmem:[#allocation3 + $0x10] sm:$0xff]
    %v176 = vld [vmem:[#allocation3 + $0x18] sm:$0xff]
    %v177 = vld [vmem:[#allocation3 + $0x20] sm:$0xff]
    %v178 = vld [vmem:[#allocation3 + $0x28] sm:$0xff]
    %v179 = vld [vmem:[#allocation3 + $0x30] sm:$0xff]
    %v180 = vld [vmem:[#allocation3 + $0x38] sm:$0xff]
    %v181 = vld [vmem:[#allocation3 + $0x40] sm:$0xff]
    %v182 = vld [vmem:[#allocation3 + $0x48] sm:$0xff]
    %v183 = vld [vmem:[#allocation3 + $0x50] sm:$0xff]
    %v184 = vld [vmem:[#allocation3 + $0x58] sm:$0xff]
    %v185 = vld [vmem:[#allocation3 + $0x60] sm:$0xff]
    %v186 = vld [vmem:[#allocation3 + $0x68] sm:$0xff]
    %v187 = vld [vmem:[#allocation3 + $0x70] sm:$0xff]
    %v188 = vld [vmem:[#allocation3 + $0x78] sm:$0xff]
    %v189 = vld [vmem:[#allocation5] sm:$0xff]
    %v190 = vld [vmem:[#allocation5 + $0x8] sm:$0xff]
    %v191 = vld [vmem:[#allocation5 + $0x10] sm:$0xff]
    %v192 = vld [vmem:[#allocation5 + $0x18] sm:$0xff]
    %v193 = vld [vmem:[#allocation5 + $0x20] sm:$0xff]
    %v194 = vld [vmem:[#allocation5 + $0x28] sm:$0xff]
    %v195 = vld [vmem:[#allocation5 + $0x30] sm:$0xff]
    %v196 = vld [vmem:[#allocation5 + $0x38] sm:$0xff]
    %v197 = vld [vmem:[#allocation5 + $0x40] sm:$0xff]
    %v198 = vld [vmem:[#allocation5 + $0x48] sm:$0xff]
    %v199 = vld [vmem:[#allocation5 + $0x50] sm:$0xff]
    %v200 = vld [vmem:[#allocation5 + $0x58] sm:$0xff]
    %v201 = vld [vmem:[#allocation5 + $0x60] sm:$0xff]
    %v202 = vld [vmem:[#allocation5 + $0x68] sm:$0xff]
    %v203 = vld [vmem:[#allocation5 + $0x70] sm:$0xff]
    %v204 = vld [vmem:[#allocation5 + $0x78] sm:$0xff]
    %v205 = vld [vmem:[#allocation5 + $0x80] sm:$0xff]
    %v206 = vld [vmem:[#allocation5 + $0x88] sm:$0xff]
    %v207 = vld [vmem:[#allocation5 + $0x90] sm:$0xff]
    %v208 = vld [vmem:[#allocation5 + $0x98] sm:$0xff]
    %v209 = vld [vmem:[#allocation5 + $0xa0] sm:$0xff]
    %v210 = vld [vmem:[#allocation5 + $0xa8] sm:$0xff]
    %v211 = vld [vmem:[#allocation5 + $0xb0] sm:$0xff]
    %v212 = vld [vmem:[#allocation5 + $0xb8] sm:$0xff]
    %v213 = vld [vmem:[#allocation5 + $0xc0] sm:$0xff]
    %v214 = vld [vmem:[#allocation5 + $0xc8] sm:$0xff]
    %v215 = vld [vmem:[#allocation5 + $0xd0] sm:$0xff]
    %v216 = vld [vmem:[#allocation5 + $0xd8] sm:$0xff]
    %v217 = vld [vmem:[#allocation5 + $0xe0] sm:$0xff]
    %v218 = vld [vmem:[#allocation5 + $0xe8] sm:$0xff]
    %v219 = vld [vmem:[#allocation5 + $0xf0] sm:$0xff]
    %v220 = vld [vmem:[#allocation5 + $0xf8] sm:$0xff]
    %v221 = vld [vmem:[%s5] sm:$0x3]
    %v223 = vlaneseq
    %v224 = vshrl.u32 %v223, 7
    %v225 = vsub.s32 0, %v224
    %v226 = vrot.slane %v221, %v225
    %v227 = vlaneseq
    %v228 = vshrl.u32 %v227, 7
    %v229 = vsub.s32 1, %v228
    %v230 = vrot.slane %v221, %v229
    %vm233 = vcmask 523264
    %v235 = vsel %vm233, 0.0, 0
    %237 = vmatprep.subr.mxu0 0.0
    %238 = vmatpush1.msra.mxu0 0.0
    %239 = vmatprep.subr.mxu0 0.0
    %240 = vmatpush1.msra.mxu0 0.0
    %241 = vmatprep.subr.mxu0 0.0
    %242 = vmatpush1.msra.mxu0 0.0
    %243 = vmatprep.subr.mxu0 0.0
    %244 = vmatpush1.msra.mxu0 0.0
    %245 = vmatprep.subr.mxu0 0.0
    %246 = vmatpush1.msra.mxu0 0.0
    %247 = vmatprep.subr.mxu0 0.0
    %248 = vmatpush1.msra.mxu0 0.0
    %249 = vmatprep.subr.mxu0 0.0
    %250 = vmatpush1.msra.mxu0 0.0
    %251 = vmatprep.subr.mxu0 0.0
    %252 = vmatpush1.msra.mxu0 0.0
    %253 = vmatprep.subr.mxu0 %v188
    %254 = vmatpush1.msra.mxu0 %v187
    %255 = vmatprep.subr.mxu0 %v186
    %256 = vmatpush1.msra.mxu0 %v185
    %257 = vmatprep.subr.mxu0 %v184
    %258 = vmatpush1.msra.mxu0 %v183
    %259 = vmatprep.subr.mxu0 %v182
    %260 = vmatpush1.msra.mxu0 %v181
    %261 = vmatprep.subr.mxu0 %v180
    %262 = vmatpush1.msra.mxu0 %v179
    %263 = vmatprep.subr.mxu0 %v178
    %264 = vmatpush1.msra.mxu0 %v177
    %265 = vmatprep.subr.mxu0 %v176
    %266 = vmatpush1.msra.mxu0 %v175
    %267 = vmatprep.subr.mxu0 %v174
    %268 = vmatpush1.msra.mxu0 %v173
    %269 = vmatprep.subr.mxu0 0.0
    %270 = vmatpush2.msra.mxu0 0.0
    %271 = vmatprep.subr.mxu0 0.0
    %272 = vmatpush2.msra.mxu0 0.0
    %273 = vmatprep.subr.mxu0 0.0
    %274 = vmatpush2.msra.mxu0 0.0
    %275 = vmatprep.subr.mxu0 0.0
    %276 = vmatpush2.msra.mxu0 0.0
    %277 = vmatprep.subr.mxu0 0.0
    %278 = vmatpush2.msra.mxu0 0.0
    %279 = vmatprep.subr.mxu0 0.0
    %280 = vmatpush2.msra.mxu0 0.0
    %281 = vmatprep.subr.mxu0 0.0
    %282 = vmatpush2.msra.mxu0 0.0
    %283 = vmatprep.subr.mxu0 0.0
    %284 = vmatpush2.msra.mxu0 0.0
    %285 = vmatprep.subr.mxu0 0.0
    %286 = vmatpush2.msra.mxu0 0.0
    %287 = vmatprep.subr.mxu0 0.0
    %288 = vmatpush2.msra.mxu0 0.0
    %289 = vmatprep.subr.mxu0 0.0
    %290 = vmatpush2.msra.mxu0 0.0
    %291 = vmatprep.subr.mxu0 0.0
    %292 = vmatpush2.msra.mxu0 0.0
    %293 = vmatprep.subr.mxu0 0.0
    %294 = vmatpush2.msra.mxu0 0.0
    %295 = vmatprep.subr.mxu0 0.0
    %296 = vmatpush2.msra.mxu0 0.0
    %297 = vmatprep.subr.mxu0 0.0
    %298 = vmatpush2.msra.mxu0 0.0
    %299 = vmatprep.subr.mxu0 0.0
    %300 = vmatpush2.msra.mxu0 0.0
    %301 = vmatprep.mubr.f32.mxu0 0.0
    %302 = vmatmul.mubr.f32.gmra.mxu0 %v235
    %v303 = vpop.f32.mrf.mxu0
    %v304 = vadd.f32 0.0, %v303
    %v305 = vpop.f32.mrf.mxu0
    %v306 = vadd.f32 0.0, %v305
    %307 = vdwg.mxu0
    %v308 = vadd.f32 %v163, %v304
    %v309 = vadd.f32 %v165, %v306
    %v310 = vxor.u32 %v308, 2147483648
    %v311 = vxor.u32 %v309, 2147483648
    %v312 = vmul.f32 %v310, 1.442695
    %v313 = vpow.pop %v312
    %v314 = vmul.f32 %v311, 1.442695
    %v315 = vpow.pop %v314
    %v316 = vadd.f32 %v313, 1.0
    %v317 = vadd.f32 %v315, 1.0
    %v318 = vrcp.pop %v316
    %v319 = vmul.f32 1.0, %v318
    %v320 = vrcp.pop %v317
    %v321 = vmul.f32 1.0, %v320
    %v322 = vmul.f32 %v321, 2.0
    %v323 = vsub.f32 %v322, 1.0
    %v324 = vmul.f32 %v319, 0.0
    %326 = vrot.lane.b32.xlu0 %v323, 64
    %v327 = vpop.permute.xlu0 %326
    %v329 = vmul.f32 %v319, %v327
    %331 = vrot.lane.b32.xlu0 %v329, 64
    %v332 = vpop.permute.xlu0 %331
    %v334 = vadd.f32 %v324, %v332
    %v335 = vtanh.pop %v334
    %337 = vrot.lane.b32.xlu0 %v335, 64
    %v338 = vpop.permute.xlu0 %337
    %v340 = vmul.f32 %v321, %v338
    %v341 = vsel %vm233, %v340, 0.0
    %342 = vmatprep.subr.mxu0 %v220
    %343 = vmatpush1.msra.mxu0 %v219
    %344 = vmatprep.subr.mxu0 %v218
    %345 = vmatpush1.msra.mxu0 %v217
    %346 = vmatprep.subr.mxu0 %v216
    %347 = vmatpush1.msra.mxu0 %v215
    %348 = vmatprep.subr.mxu0 %v214
    %349 = vmatpush1.msra.mxu0 %v213
    %350 = vmatprep.subr.mxu0 %v212
    %351 = vmatpush1.msra.mxu0 %v211
    %352 = vmatprep.subr.mxu0 %v210
    %353 = vmatpush1.msra.mxu0 %v209
    %354 = vmatprep.subr.mxu0 %v208
    %355 = vmatpush1.msra.mxu0 %v207
    %356 = vmatprep.subr.mxu0 %v206
    %357 = vmatpush1.msra.mxu0 %v205
    %358 = vmatprep.subr.mxu0 %v204
    %359 = vmatpush1.msra.mxu0 %v203
    %360 = vmatprep.subr.mxu0 %v202
    %361 = vmatpush1.msra.mxu0 %v201
    %362 = vmatprep.subr.mxu0 %v200
    %363 = vmatpush1.msra.mxu0 %v199
    %364 = vmatprep.subr.mxu0 %v198
    %365 = vmatpush1.msra.mxu0 %v197
    %366 = vmatprep.subr.mxu0 %v196
    %367 = vmatpush1.msra.mxu0 %v195
    %368 = vmatprep.subr.mxu0 %v194
    %369 = vmatpush1.msra.mxu0 %v193
    %370 = vmatprep.subr.mxu0 %v192
    %371 = vmatpush1.msra.mxu0 %v191
    %372 = vmatprep.subr.mxu0 %v190
    %373 = vmatpush1.msra.mxu0 %v189
    %374 = vmatprep.subr.mxu0 0.0
    %375 = vmatpush2.msra.mxu0 0.0
    %376 = vmatprep.subr.mxu0 0.0
    %377 = vmatpush2.msra.mxu0 0.0
    %378 = vmatprep.subr.mxu0 0.0
    %379 = vmatpush2.msra.mxu0 0.0
    %380 = vmatprep.subr.mxu0 0.0
    %381 = vmatpush2.msra.mxu0 0.0
    %382 = vmatprep.subr.mxu0 0.0
    %383 = vmatpush2.msra.mxu0 0.0
    %384 = vmatprep.subr.mxu0 0.0
    %385 = vmatpush2.msra.mxu0 0.0
    %386 = vmatprep.subr.mxu0 0.0
    %387 = vmatpush2.msra.mxu0 0.0
    %388 = vmatprep.subr.mxu0 0.0
    %389 = vmatpush2.msra.mxu0 0.0
    %390 = vmatprep.subr.mxu0 0.0
    %391 = vmatpush2.msra.mxu0 0.0
    %392 = vmatprep.subr.mxu0 0.0
    %393 = vmatpush2.msra.mxu0 0.0
    %394 = vmatprep.subr.mxu0 0.0
    %395 = vmatpush2.msra.mxu0 0.0
    %396 = vmatprep.subr.mxu0 0.0
    %397 = vmatpush2.msra.mxu0 0.0
    %398 = vmatprep.subr.mxu0 0.0
    %399 = vmatpush2.msra.mxu0 0.0
    %400 = vmatprep.subr.mxu0 0.0
    %401 = vmatpush2.msra.mxu0 0.0
    %402 = vmatprep.subr.mxu0 0.0
    %403 = vmatpush2.msra.mxu0 0.0
    %404 = vmatprep.subr.mxu0 0.0
    %405 = vmatpush2.msra.mxu0 0.0
    %406 = vmatprep.mubr.f32.mxu0 0.0
    %407 = vmatmul.mubr.f32.gmra.mxu0 %v341
    %v408 = vpop.f32.mrf.mxu0
    %v409 = vadd.f32 %v226, %v408
    %v410 = vpop.f32.mrf.mxu0
    %v411 = vadd.f32 %v230, %v410
    %412 = vdwg.mxu0
    %v413 = vxor.u32 %v409, 2147483648
    %v414 = vxor.u32 %v411, 2147483648
    %v415 = vmul.f32 %v413, 1.442695
    %v416 = vpow.pop %v415
    %v417 = vmul.f32 %v414, 1.442695
    %v418 = vpow.pop %v417
    %v419 = vadd.f32 %v416, 1.0
    %v420 = vadd.f32 %v418, 1.0
    %v421 = vrcp.pop %v419
    %v422 = vmul.f32 1.0, %v421
    %v423 = vrcp.pop %v420
    %v424 = vmul.f32 1.0, %v423
    %v425 = vmul.f32 %v424, 2.0
    %v426 = vsub.f32 %v425, 1.0
    %v427 = vmul.f32 %v422, 0.0
    %429 = vrot.lane.b32.xlu0 %v426, 64
    %v430 = vpop.permute.xlu0 %429
    %v432 = vmul.f32 %v422, %v430
    %434 = vrot.lane.b32.xlu0 %v432, 64
    %v435 = vpop.permute.xlu0 %434
    %v437 = vadd.f32 %v427, %v435
    %v438 = vtanh.pop %v437
    %440 = vrot.lane.b32.xlu0 %v438, 64
    %v441 = vpop.permute.xlu0 %440
    %v443 = vmul.f32 %v424, %v441
    %v445 = vsel %vm233, %v340, 0
    %447 = vmatprep.subr.mxu0 0.0
    %448 = vmatpush1.msra.mxu0 0.0
    %449 = vmatprep.subr.mxu0 0.0
    %450 = vmatpush1.msra.mxu0 0.0
    %451 = vmatprep.subr.mxu0 0.0
    %452 = vmatpush1.msra.mxu0 0.0
    %453 = vmatprep.subr.mxu0 0.0
    %454 = vmatpush1.msra.mxu0 0.0
    %455 = vmatprep.subr.mxu0 0.0
    %456 = vmatpush1.msra.mxu0 0.0
    %457 = vmatprep.subr.mxu0 0.0
    %458 = vmatpush1.msra.mxu0 0.0
    %459 = vmatprep.subr.mxu0 0.0
    %460 = vmatpush1.msra.mxu0 0.0
    %461 = vmatprep.subr.mxu0 0.0
    %462 = vmatpush1.msra.mxu0 0.0
    %463 = vmatprep.subr.mxu0 %v188
    %464 = vmatpush1.msra.mxu0 %v187
    %465 = vmatprep.subr.mxu0 %v186
    %466 = vmatpush1.msra.mxu0 %v185
    %467 = vmatprep.subr.mxu0 %v184
    %468 = vmatpush1.msra.mxu0 %v183
    %469 = vmatprep.subr.mxu0 %v182
    %470 = vmatpush1.msra.mxu0 %v181
    %471 = vmatprep.subr.mxu0 %v180
    %472 = vmatpush1.msra.mxu0 %v179
    %473 = vmatprep.subr.mxu0 %v178
    %474 = vmatpush1.msra.mxu0 %v177
    %475 = vmatprep.subr.mxu0 %v176
    %476 = vmatpush1.msra.mxu0 %v175
    %477 = vmatprep.subr.mxu0 %v174
    %478 = vmatpush1.msra.mxu0 %v173
    %479 = vmatprep.subr.mxu0 0.0
    %480 = vmatpush2.msra.mxu0 0.0
    %481 = vmatprep.subr.mxu0 0.0
    %482 = vmatpush2.msra.mxu0 0.0
    %483 = vmatprep.subr.mxu0 0.0
    %484 = vmatpush2.msra.mxu0 0.0
    %485 = vmatprep.subr.mxu0 0.0
    %486 = vmatpush2.msra.mxu0 0.0
    %487 = vmatprep.subr.mxu0 0.0
    %488 = vmatpush2.msra.mxu0 0.0
    %489 = vmatprep.subr.mxu0 0.0
    %490 = vmatpush2.msra.mxu0 0.0
    %491 = vmatprep.subr.mxu0 0.0
    %492 = vmatpush2.msra.mxu0 0.0
    %493 = vmatprep.subr.mxu0 0.0
    %494 = vmatpush2.msra.mxu0 0.0
    %495 = vmatprep.subr.mxu0 0.0
    %496 = vmatpush2.msra.mxu0 0.0
    %497 = vmatprep.subr.mxu0 0.0
    %498 = vmatpush2.msra.mxu0 0.0
    %499 = vmatprep.subr.mxu0 0.0
    %500 = vmatpush2.msra.mxu0 0.0
    %501 = vmatprep.subr.mxu0 0.0
    %502 = vmatpush2.msra.mxu0 0.0
    %503 = vmatprep.subr.mxu0 0.0
    %504 = vmatpush2.msra.mxu0 0.0
    %505 = vmatprep.subr.mxu0 0.0
    %506 = vmatpush2.msra.mxu0 0.0
    %507 = vmatprep.subr.mxu0 0.0
    %508 = vmatpush2.msra.mxu0 0.0
    %509 = vmatprep.subr.mxu0 0.0
    %510 = vmatpush2.msra.mxu0 0.0
    %511 = vmatprep.mubr.f32.mxu0 0.0
    %512 = vmatmul.mubr.f32.gmra.mxu0 %v445
    %v513 = vpop.f32.mrf.mxu0
    %v514 = vadd.f32 0.0, %v513
    %v515 = vpop.f32.mrf.mxu0
    %v516 = vadd.f32 0.0, %v515
    %517 = vdwg.mxu0
    %v520 = vrot.slane %v514, 6
    %v521 = vrot.slane %v516, 6
    %v524 = vadd.f32 %v163, %v520
    %v525 = vadd.f32 %v165, %v521
    %v526 = vxor.u32 %v524, 2147483648
    %v527 = vxor.u32 %v525, 2147483648
    %v528 = vmul.f32 %v526, 1.442695
    %v529 = vpow.pop %v528
    %v530 = vmul.f32 %v527, 1.442695
    %v531 = vpow.pop %v530
    %v532 = vadd.f32 %v529, 1.0
    %v533 = vadd.f32 %v531, 1.0
    %v534 = vrcp.pop %v532
    %v535 = vmul.f32 1.0, %v534
    %v536 = vrcp.pop %v533
    %v537 = vmul.f32 1.0, %v536
    %v538 = vmul.f32 %v537, 2.0
    %v539 = vsub.f32 %v538, 1.0
    %v541 = vrot.slane %v334, 6
    %v543 = vmul.f32 %v535, %v541
    %545 = vrot.lane.b32.xlu0 %v539, 64
    %v546 = vpop.permute.xlu0 %545
    %v548 = vmul.f32 %v535, %v546
    %550 = vrot.lane.b32.xlu0 %v548, 64
    %v551 = vpop.permute.xlu0 %550
    %v553 = vadd.f32 %v543, %v551
    %v554 = vtanh.pop %v553
    %556 = vrot.lane.b32.xlu0 %v554, 64
    %v557 = vpop.permute.xlu0 %556
    %v559 = vmul.f32 %v537, %v557
    %v561 = vrot.slane %v443, 6
    %562 = vrot.lane.b32.xlu0 %v561, 64
    %v563 = vpop.permute.xlu0 %562
    %v565 = vsel %vm233, %v559, %v563
    %v567 = vrot.slane %v565, 2
    %569 = vmatprep.subr.mxu0 %v220
    %570 = vmatpush1.msra.mxu0 %v219
    %571 = vmatprep.subr.mxu0 %v218
    %572 = vmatpush1.msra.mxu0 %v217
    %573 = vmatprep.subr.mxu0 %v216
    %574 = vmatpush1.msra.mxu0 %v215
    %575 = vmatprep.subr.mxu0 %v214
    %576 = vmatpush1.msra.mxu0 %v213
    %577 = vmatprep.subr.mxu0 %v212
    %578 = vmatpush1.msra.mxu0 %v211
    %579 = vmatprep.subr.mxu0 %v210
    %580 = vmatpush1.msra.mxu0 %v209
    %581 = vmatprep.subr.mxu0 %v208
    %582 = vmatpush1.msra.mxu0 %v207
    %583 = vmatprep.subr.mxu0 %v206
    %584 = vmatpush1.msra.mxu0 %v205
    %585 = vmatprep.subr.mxu0 %v204
    %586 = vmatpush1.msra.mxu0 %v203
    %587 = vmatprep.subr.mxu0 %v202
    %588 = vmatpush1.msra.mxu0 %v201
    %589 = vmatprep.subr.mxu0 %v200
    %590 = vmatpush1.msra.mxu0 %v199
    %591 = vmatprep.subr.mxu0 %v198
    %592 = vmatpush1.msra.mxu0 %v197
    %593 = vmatprep.subr.mxu0 %v196
    %594 = vmatpush1.msra.mxu0 %v195
    %595 = vmatprep.subr.mxu0 %v194
    %596 = vmatpush1.msra.mxu0 %v193
    %597 = vmatprep.subr.mxu0 %v192
    %598 = vmatpush1.msra.mxu0 %v191
    %599 = vmatprep.subr.mxu0 %v190
    %600 = vmatpush1.msra.mxu0 %v189
    %601 = vmatprep.subr.mxu0 0.0
    %602 = vmatpush2.msra.mxu0 0.0
    %603 = vmatprep.subr.mxu0 0.0
    %604 = vmatpush2.msra.mxu0 0.0
    %605 = vmatprep.subr.mxu0 0.0
    %606 = vmatpush2.msra.mxu0 0.0
    %607 = vmatprep.subr.mxu0 0.0
    %608 = vmatpush2.msra.mxu0 0.0
    %609 = vmatprep.subr.mxu0 0.0
    %610 = vmatpush2.msra.mxu0 0.0
    %611 = vmatprep.subr.mxu0 0.0
    %612 = vmatpush2.msra.mxu0 0.0
    %613 = vmatprep.subr.mxu0 0.0
    %614 = vmatpush2.msra.mxu0 0.0
    %615 = vmatprep.subr.mxu0 0.0
    %616 = vmatpush2.msra.mxu0 0.0
    %617 = vmatprep.subr.mxu0 0.0
    %618 = vmatpush2.msra.mxu0 0.0
    %619 = vmatprep.subr.mxu0 0.0
    %620 = vmatpush2.msra.mxu0 0.0
    %621 = vmatprep.subr.mxu0 0.0
    %622 = vmatpush2.msra.mxu0 0.0
    %623 = vmatprep.subr.mxu0 0.0
    %624 = vmatpush2.msra.mxu0 0.0
    %625 = vmatprep.subr.mxu0 0.0
    %626 = vmatpush2.msra.mxu0 0.0
    %627 = vmatprep.subr.mxu0 0.0
    %628 = vmatpush2.msra.mxu0 0.0
    %629 = vmatprep.subr.mxu0 0.0
    %630 = vmatpush2.msra.mxu0 0.0
    %631 = vmatprep.subr.mxu0 0.0
    %632 = vmatpush2.msra.mxu0 0.0
    %633 = vmatprep.mubr.f32.mxu0 0.0
    %634 = vmatmul.mubr.f32.gmra.mxu0 %v567
    %v635 = vpop.f32.mrf.mxu0
    %v636 = vadd.f32 %v226, %v635
    %v637 = vpop.f32.mrf.mxu0
    %v638 = vadd.f32 %v230, %v637
    %639 = vdwg.mxu0
    %v640 = vxor.u32 %v636, 2147483648
    %v641 = vxor.u32 %v638, 2147483648
    %v642 = vmul.f32 %v640, 1.442695
    %v643 = vpow.pop %v642
    %v644 = vmul.f32 %v641, 1.442695
    %v645 = vpow.pop %v644
    %v646 = vadd.f32 %v643, 1.0
    %v647 = vadd.f32 %v645, 1.0
    %v648 = vrcp.pop %v646
    %v649 = vmul.f32 1.0, %v648
    %v650 = vrcp.pop %v647
    %v651 = vmul.f32 1.0, %v650
    %v652 = vmul.f32 %v651, 2.0
    %v653 = vsub.f32 %v652, 1.0
    %v654 = vmul.f32 %v649, %v437
    %656 = vrot.lane.b32.xlu0 %v653, 64
    %v657 = vpop.permute.xlu0 %656
    %v659 = vmul.f32 %v649, %v657
    %661 = vrot.lane.b32.xlu0 %v659, 64
    %v662 = vpop.permute.xlu0 %661
    %v664 = vadd.f32 %v654, %v662
    %v665 = vtanh.pop %v664
    %667 = vrot.lane.b32.xlu0 %v665, 64
    %v668 = vpop.permute.xlu0 %667
    %v670 = vmul.f32 %v651, %v668
    %v672 = vrot.slane %v559, 2
    %v673 = vsel %vm233, %v672, 0
    %675 = vmatprep.subr.mxu0 0.0
    %676 = vmatpush1.msra.mxu0 0.0
    %677 = vmatprep.subr.mxu0 0.0
    %678 = vmatpush1.msra.mxu0 0.0
    %679 = vmatprep.subr.mxu0 0.0
    %680 = vmatpush1.msra.mxu0 0.0
    %681 = vmatprep.subr.mxu0 0.0
    %682 = vmatpush1.msra.mxu0 0.0
    %683 = vmatprep.subr.mxu0 0.0
    %684 = vmatpush1.msra.mxu0 0.0
    %685 = vmatprep.subr.mxu0 0.0
    %686 = vmatpush1.msra.mxu0 0.0
    %687 = vmatprep.subr.mxu0 0.0
    %688 = vmatpush1.msra.mxu0 0.0
    %689 = vmatprep.subr.mxu0 0.0
    %690 = vmatpush1.msra.mxu0 0.0
    %691 = vmatprep.subr.mxu0 %v188
    %692 = vmatpush1.msra.mxu0 %v187
    %693 = vmatprep.subr.mxu0 %v186
    %694 = vmatpush1.msra.mxu0 %v185
    %695 = vmatprep.subr.mxu0 %v184
    %696 = vmatpush1.msra.mxu0 %v183
    %697 = vmatprep.subr.mxu0 %v182
    %698 = vmatpush1.msra.mxu0 %v181
    %699 = vmatprep.subr.mxu0 %v180
    %700 = vmatpush1.msra.mxu0 %v179
    %701 = vmatprep.subr.mxu0 %v178
    %702 = vmatpush1.msra.mxu0 %v177
    %703 = vmatprep.subr.mxu0 %v176
    %704 = vmatpush1.msra.mxu0 %v175
    %705 = vmatprep.subr.mxu0 %v174
    %706 = vmatpush1.msra.mxu0 %v173
    %707 = vmatprep.subr.mxu0 0.0
    %708 = vmatpush2.msra.mxu0 0.0
    %709 = vmatprep.subr.mxu0 0.0
    %710 = vmatpush2.msra.mxu0 0.0
    %711 = vmatprep.subr.mxu0 0.0
    %712 = vmatpush2.msra.mxu0 0.0
    %713 = vmatprep.subr.mxu0 0.0
    %714 = vmatpush2.msra.mxu0 0.0
    %715 = vmatprep.subr.mxu0 0.0
    %716 = vmatpush2.msra.mxu0 0.0
    %717 = vmatprep.subr.mxu0 0.0
    %718 = vmatpush2.msra.mxu0 0.0
    %719 = vmatprep.subr.mxu0 0.0
    %720 = vmatpush2.msra.mxu0 0.0
    %721 = vmatprep.subr.mxu0 0.0
    %722 = vmatpush2.msra.mxu0 0.0
    %723 = vmatprep.subr.mxu0 0.0
    %724 = vmatpush2.msra.mxu0 0.0
    %725 = vmatprep.subr.mxu0 0.0
    %726 = vmatpush2.msra.mxu0 0.0
    %727 = vmatprep.subr.mxu0 0.0
    %728 = vmatpush2.msra.mxu0 0.0
    %729 = vmatprep.subr.mxu0 0.0
    %730 = vmatpush2.msra.mxu0 0.0
    %731 = vmatprep.subr.mxu0 0.0
    %732 = vmatpush2.msra.mxu0 0.0
    %733 = vmatprep.subr.mxu0 0.0
    %734 = vmatpush2.msra.mxu0 0.0
    %735 = vmatprep.subr.mxu0 0.0
    %736 = vmatpush2.msra.mxu0 0.0
    %737 = vmatprep.subr.mxu0 0.0
    %738 = vmatpush2.msra.mxu0 0.0
    %739 = vmatprep.mubr.f32.mxu0 0.0
    %740 = vmatmul.mubr.f32.gmra.mxu0 %v673
    %v741 = vpop.f32.mrf.mxu0
    %v742 = vadd.f32 0.0, %v741
    %v743 = vpop.f32.mrf.mxu0
    %v744 = vadd.f32 0.0, %v743
    %745 = vdwg.mxu0
    %v748 = vrot.slane %v742, 4
    %v749 = vrot.slane %v744, 4
    %v752 = vadd.f32 %v163, %v748
    %v753 = vadd.f32 %v165, %v749
    %v754 = vxor.u32 %v752, 2147483648
    %v755 = vxor.u32 %v753, 2147483648
    %v756 = vmul.f32 %v754, 1.442695
    %v757 = vpow.pop %v756
    %v758 = vmul.f32 %v755, 1.442695
    %v759 = vpow.pop %v758
    %v760 = vadd.f32 %v757, 1.0
    %v761 = vadd.f32 %v759, 1.0
    %v762 = vrcp.pop %v760
    %v763 = vmul.f32 1.0, %v762
    %v764 = vrcp.pop %v761
    %v765 = vmul.f32 1.0, %v764
    %v766 = vmul.f32 %v765, 2.0
    %v767 = vsub.f32 %v766, 1.0
    %v769 = vrot.slane %v553, 6
    %v771 = vmul.f32 %v763, %v769
    %773 = vrot.lane.b32.xlu0 %v767, 64
    %v774 = vpop.permute.xlu0 %773
    %v776 = vmul.f32 %v763, %v774
    %778 = vrot.lane.b32.xlu0 %v776, 64
    %v779 = vpop.permute.xlu0 %778
    %v781 = vadd.f32 %v771, %v779
    %v782 = vtanh.pop %v781
    %784 = vrot.lane.b32.xlu0 %v782, 64
    %v785 = vpop.permute.xlu0 %784
    %v787 = vmul.f32 %v765, %v785
    %v789 = vrot.slane %v670, 4
    %790 = vrot.lane.b32.xlu0 %v789, 64
    %v791 = vpop.permute.xlu0 %790
    %v793 = vsel %vm233, %v787, %v791
    %v795 = vrot.slane %v793, 4
    %797 = vmatprep.subr.mxu0 %v220
    %798 = vmatpush1.msra.mxu0 %v219
    %799 = vmatprep.subr.mxu0 %v218
    %800 = vmatpush1.msra.mxu0 %v217
    %801 = vmatprep.subr.mxu0 %v216
    %802 = vmatpush1.msra.mxu0 %v215
    %803 = vmatprep.subr.mxu0 %v214
    %804 = vmatpush1.msra.mxu0 %v213
    %805 = vmatprep.subr.mxu0 %v212
    %806 = vmatpush1.msra.mxu0 %v211
    %807 = vmatprep.subr.mxu0 %v210
    %808 = vmatpush1.msra.mxu0 %v209
    %809 = vmatprep.subr.mxu0 %v208
    %810 = vmatpush1.msra.mxu0 %v207
    %811 = vmatprep.subr.mxu0 %v206
    %812 = vmatpush1.msra.mxu0 %v205
    %813 = vmatprep.subr.mxu0 %v204
    %814 = vmatpush1.msra.mxu0 %v203
    %815 = vmatprep.subr.mxu0 %v202
    %816 = vmatpush1.msra.mxu0 %v201
    %817 = vmatprep.subr.mxu0 %v200
    %818 = vmatpush1.msra.mxu0 %v199
    %819 = vmatprep.subr.mxu0 %v198
    %820 = vmatpush1.msra.mxu0 %v197
    %821 = vmatprep.subr.mxu0 %v196
    %822 = vmatpush1.msra.mxu0 %v195
    %823 = vmatprep.subr.mxu0 %v194
    %824 = vmatpush1.msra.mxu0 %v193
    %825 = vmatprep.subr.mxu0 %v192
    %826 = vmatpush1.msra.mxu0 %v191
    %827 = vmatprep.subr.mxu0 %v190
    %828 = vmatpush1.msra.mxu0 %v189
    %829 = vmatprep.subr.mxu0 0.0
    %830 = vmatpush2.msra.mxu0 0.0
    %831 = vmatprep.subr.mxu0 0.0
    %832 = vmatpush2.msra.mxu0 0.0
    %833 = vmatprep.subr.mxu0 0.0
    %834 = vmatpush2.msra.mxu0 0.0
    %835 = vmatprep.subr.mxu0 0.0
    %836 = vmatpush2.msra.mxu0 0.0
    %837 = vmatprep.subr.mxu0 0.0
    %838 = vmatpush2.msra.mxu0 0.0
    %839 = vmatprep.subr.mxu0 0.0
    %840 = vmatpush2.msra.mxu0 0.0
    %841 = vmatprep.subr.mxu0 0.0
    %842 = vmatpush2.msra.mxu0 0.0
    %843 = vmatprep.subr.mxu0 0.0
    %844 = vmatpush2.msra.mxu0 0.0
    %845 = vmatprep.subr.mxu0 0.0
    %846 = vmatpush2.msra.mxu0 0.0
    %847 = vmatprep.subr.mxu0 0.0
    %848 = vmatpush2.msra.mxu0 0.0
    %849 = vmatprep.subr.mxu0 0.0
    %850 = vmatpush2.msra.mxu0 0.0
    %851 = vmatprep.subr.mxu0 0.0
    %852 = vmatpush2.msra.mxu0 0.0
    %853 = vmatprep.subr.mxu0 0.0
    %854 = vmatpush2.msra.mxu0 0.0
    %855 = vmatprep.subr.mxu0 0.0
    %856 = vmatpush2.msra.mxu0 0.0
    %857 = vmatprep.subr.mxu0 0.0
    %858 = vmatpush2.msra.mxu0 0.0
    %859 = vmatprep.subr.mxu0 0.0
    %860 = vmatpush2.msra.mxu0 0.0
    %861 = vmatprep.mubr.f32.mxu0 0.0
    %862 = vmatmul.mubr.f32.gmra.mxu0 %v795
    %v863 = vpop.f32.mrf.mxu0
    %v864 = vadd.f32 %v226, %v863
    %v865 = vpop.f32.mrf.mxu0
    %v866 = vadd.f32 %v230, %v865
    %867 = vdwg.mxu0
    %v868 = vxor.u32 %v864, 2147483648
    %v869 = vxor.u32 %v866, 2147483648
    %v870 = vmul.f32 %v868, 1.442695
    %v871 = vpow.pop %v870
    %v872 = vmul.f32 %v869, 1.442695
    %v873 = vpow.pop %v872
    %v874 = vadd.f32 %v871, 1.0
    %v875 = vadd.f32 %v873, 1.0
    %v876 = vrcp.pop %v874
    %v877 = vmul.f32 1.0, %v876
    %v878 = vrcp.pop %v875
    %v879 = vmul.f32 1.0, %v878
    %v880 = vmul.f32 %v879, 2.0
    %v881 = vsub.f32 %v880, 1.0
    %v882 = vmul.f32 %v877, %v664
    %884 = vrot.lane.b32.xlu0 %v881, 64
    %v885 = vpop.permute.xlu0 %884
    %v887 = vmul.f32 %v877, %v885
    %889 = vrot.lane.b32.xlu0 %v887, 64
    %v890 = vpop.permute.xlu0 %889
    %v892 = vadd.f32 %v882, %v890
    %v893 = vtanh.pop %v892
    %895 = vrot.lane.b32.xlu0 %v893, 64
    %v896 = vpop.permute.xlu0 %895
    %v898 = vmul.f32 %v879, %v896
    %v900 = vrot.slane %v787, 4
    %v901 = vsel %vm233, %v900, 0
    %903 = vmatprep.subr.mxu0 0.0
    %904 = vmatpush1.msra.mxu0 0.0
    %905 = vmatprep.subr.mxu0 0.0
    %906 = vmatpush1.msra.mxu0 0.0
    %907 = vmatprep.subr.mxu0 0.0
    %908 = vmatpush1.msra.mxu0 0.0
    %909 = vmatprep.subr.mxu0 0.0
    %910 = vmatpush1.msra.mxu0 0.0
    %911 = vmatprep.subr.mxu0 0.0
    %912 = vmatpush1.msra.mxu0 0.0
    %913 = vmatprep.subr.mxu0 0.0
    %914 = vmatpush1.msra.mxu0 0.0
    %915 = vmatprep.subr.mxu0 0.0
    %916 = vmatpush1.msra.mxu0 0.0
    %917 = vmatprep.subr.mxu0 0.0
    %918 = vmatpush1.msra.mxu0 0.0
    %919 = vmatprep.subr.mxu0 %v188
    %920 = vmatpush1.msra.mxu0 %v187
    %921 = vmatprep.subr.mxu0 %v186
    %922 = vmatpush1.msra.mxu0 %v185
    %923 = vmatprep.subr.mxu0 %v184
    %924 = vmatpush1.msra.mxu0 %v183
    %925 = vmatprep.subr.mxu0 %v182
    %926 = vmatpush1.msra.mxu0 %v181
    %927 = vmatprep.subr.mxu0 %v180
    %928 = vmatpush1.msra.mxu0 %v179
    %929 = vmatprep.subr.mxu0 %v178
    %930 = vmatpush1.msra.mxu0 %v177
    %931 = vmatprep.subr.mxu0 %v176
    %932 = vmatpush1.msra.mxu0 %v175
    %933 = vmatprep.subr.mxu0 %v174
    %934 = vmatpush1.msra.mxu0 %v173
    %935 = vmatprep.subr.mxu0 0.0
    %936 = vmatpush2.msra.mxu0 0.0
    %937 = vmatprep.subr.mxu0 0.0
    %938 = vmatpush2.msra.mxu0 0.0
    %939 = vmatprep.subr.mxu0 0.0
    %940 = vmatpush2.msra.mxu0 0.0
    %941 = vmatprep.subr.mxu0 0.0
    %942 = vmatpush2.msra.mxu0 0.0
    %943 = vmatprep.subr.mxu0 0.0
    %944 = vmatpush2.msra.mxu0 0.0
    %945 = vmatprep.subr.mxu0 0.0
    %946 = vmatpush2.msra.mxu0 0.0
    %947 = vmatprep.subr.mxu0 0.0
    %948 = vmatpush2.msra.mxu0 0.0
    %949 = vmatprep.subr.mxu0 0.0
    %950 = vmatpush2.msra.mxu0 0.0
    %951 = vmatprep.subr.mxu0 0.0
    %952 = vmatpush2.msra.mxu0 0.0
    %953 = vmatprep.subr.mxu0 0.0
    %954 = vmatpush2.msra.mxu0 0.0
    %955 = vmatprep.subr.mxu0 0.0
    %956 = vmatpush2.msra.mxu0 0.0
    %957 = vmatprep.subr.mxu0 0.0
    %958 = vmatpush2.msra.mxu0 0.0
    %959 = vmatprep.subr.mxu0 0.0
    %960 = vmatpush2.msra.mxu0 0.0
    %961 = vmatprep.subr.mxu0 0.0
    %962 = vmatpush2.msra.mxu0 0.0
    %963 = vmatprep.subr.mxu0 0.0
    %964 = vmatpush2.msra.mxu0 0.0
    %965 = vmatprep.subr.mxu0 0.0
    %966 = vmatpush2.msra.mxu0 0.0
    %967 = vmatprep.mubr.f32.mxu0 0.0
    %968 = vmatmul.mubr.f32.gmra.mxu0 %v901
    %v969 = vpop.f32.mrf.mxu0
    %v970 = vadd.f32 0.0, %v969
    %v971 = vpop.f32.mrf.mxu0
    %v972 = vadd.f32 0.0, %v971
    %973 = vdwg.mxu0
    %v976 = vrot.slane %v970, 2
    %v977 = vrot.slane %v972, 2
    %v980 = vadd.f32 %v163, %v976
    %v981 = vadd.f32 %v165, %v977
    %v982 = vxor.u32 %v980, 2147483648
    %v983 = vxor.u32 %v981, 2147483648
    %v984 = vmul.f32 %v982, 1.442695
    %v985 = vpow.pop %v984
    %v986 = vmul.f32 %v983, 1.442695
    %v987 = vpow.pop %v986
    %v988 = vadd.f32 %v985, 1.0
    %v989 = vadd.f32 %v987, 1.0
    %v990 = vrcp.pop %v988
    %v991 = vmul.f32 1.0, %v990
    %v992 = vrcp.pop %v989
    %v993 = vmul.f32 1.0, %v992
    %v994 = vmul.f32 %v993, 2.0
    %v995 = vsub.f32 %v994, 1.0
    %v997 = vrot.slane %v781, 6
    %v999 = vmul.f32 %v991, %v997
    %1001 = vrot.lane.b32.xlu0 %v995, 64
    %v1002 = vpop.permute.xlu0 %1001
    %v1004 = vmul.f32 %v991, %v1002
    %1006 = vrot.lane.b32.xlu0 %v1004, 64
    %v1007 = vpop.permute.xlu0 %1006
    %v1009 = vadd.f32 %v999, %v1007
    %v1010 = vtanh.pop %v1009
    %1012 = vrot.lane.b32.xlu0 %v1010, 64
    %v1013 = vpop.permute.xlu0 %1012
    %v1015 = vmul.f32 %v993, %v1013
    %v1017 = vrot.slane %v898, 2
    %1018 = vrot.lane.b32.xlu0 %v1017, 64
    %v1019 = vpop.permute.xlu0 %1018
    %v1021 = vsel %vm233, %v1015, %v1019
    %v1023 = vrot.slane %v1021, 6
    %1025 = vmatprep.subr.mxu0 %v220
    %1026 = vmatpush1.msra.mxu0 %v219
    %1027 = vmatprep.subr.mxu0 %v218
    %1028 = vmatpush1.msra.mxu0 %v217
    %1029 = vmatprep.subr.mxu0 %v216
    %1030 = vmatpush1.msra.mxu0 %v215
    %1031 = vmatprep.subr.mxu0 %v214
    %1032 = vmatpush1.msra.mxu0 %v213
    %1033 = vmatprep.subr.mxu0 %v212
    %1034 = vmatpush1.msra.mxu0 %v211
    %1035 = vmatprep.subr.mxu0 %v210
    %1036 = vmatpush1.msra.mxu0 %v209
    %1037 = vmatprep.subr.mxu0 %v208
    %1038 = vmatpush1.msra.mxu0 %v207
    %1039 = vmatprep.subr.mxu0 %v206
    %1040 = vmatpush1.msra.mxu0 %v205
    %1041 = vmatprep.subr.mxu0 %v204
    %1042 = vmatpush1.msra.mxu0 %v203
    %1043 = vmatprep.subr.mxu0 %v202
    %1044 = vmatpush1.msra.mxu0 %v201
    %1045 = vmatprep.subr.mxu0 %v200
    %1046 = vmatpush1.msra.mxu0 %v199
    %1047 = vmatprep.subr.mxu0 %v198
    %1048 = vmatpush1.msra.mxu0 %v197
    %1049 = vmatprep.subr.mxu0 %v196
    %1050 = vmatpush1.msra.mxu0 %v195
    %1051 = vmatprep.subr.mxu0 %v194
    %1052 = vmatpush1.msra.mxu0 %v193
    %1053 = vmatprep.subr.mxu0 %v192
    %1054 = vmatpush1.msra.mxu0 %v191
    %1055 = vmatprep.subr.mxu0 %v190
    %1056 = vmatpush1.msra.mxu0 %v189
    %1057 = vmatprep.subr.mxu0 0.0
    %1058 = vmatpush2.msra.mxu0 0.0
    %1059 = vmatprep.subr.mxu0 0.0
    %1060 = vmatpush2.msra.mxu0 0.0
    %1061 = vmatprep.subr.mxu0 0.0
    %1062 = vmatpush2.msra.mxu0 0.0
    %1063 = vmatprep.subr.mxu0 0.0
    %1064 = vmatpush2.msra.mxu0 0.0
    %1065 = vmatprep.subr.mxu0 0.0
    %1066 = vmatpush2.msra.mxu0 0.0
    %1067 = vmatprep.subr.mxu0 0.0
    %1068 = vmatpush2.msra.mxu0 0.0
    %1069 = vmatprep.subr.mxu0 0.0
    %1070 = vmatpush2.msra.mxu0 0.0
    %1071 = vmatprep.subr.mxu0 0.0
    %1072 = vmatpush2.msra.mxu0 0.0
    %1073 = vmatprep.subr.mxu0 0.0
    %1074 = vmatpush2.msra.mxu0 0.0
    %1075 = vmatprep.subr.mxu0 0.0
    %1076 = vmatpush2.msra.mxu0 0.0
    %1077 = vmatprep.subr.mxu0 0.0
    %1078 = vmatpush2.msra.mxu0 0.0
    %1079 = vmatprep.subr.mxu0 0.0
    %1080 = vmatpush2.msra.mxu0 0.0
    %1081 = vmatprep.subr.mxu0 0.0
    %1082 = vmatpush2.msra.mxu0 0.0
    %1083 = vmatprep.subr.mxu0 0.0
    %1084 = vmatpush2.msra.mxu0 0.0
    %1085 = vmatprep.subr.mxu0 0.0
    %1086 = vmatpush2.msra.mxu0 0.0
    %1087 = vmatprep.subr.mxu0 0.0
    %1088 = vmatpush2.msra.mxu0 0.0
    %1089 = vmatprep.mubr.f32.mxu0 0.0
    %1090 = vmatmul.mubr.f32.gmra.mxu0 %v1023
    %v1091 = vpop.f32.mrf.mxu0
    %v1092 = vadd.f32 %v226, %v1091
    %v1093 = vpop.f32.mrf.mxu0
    %v1094 = vadd.f32 %v230, %v1093
    %1095 = vdwg.mxu0
    %v1096 = vxor.u32 %v1092, 2147483648
    %v1097 = vxor.u32 %v1094, 2147483648
    %v1098 = vmul.f32 %v1096, 1.442695
    %v1099 = vpow.pop %v1098
    %v1100 = vmul.f32 %v1097, 1.442695
    %v1101 = vpow.pop %v1100
    %v1102 = vadd.f32 %v1099, 1.0
    %v1103 = vadd.f32 %v1101, 1.0
    %v1104 = vrcp.pop %v1102
    %v1105 = vmul.f32 1.0, %v1104
    %v1106 = vrcp.pop %v1103
    %v1107 = vmul.f32 1.0, %v1106
    %v1108 = vmul.f32 %v1107, 2.0
    %v1109 = vsub.f32 %v1108, 1.0
    %v1110 = vmul.f32 %v1105, %v892
    %1112 = vrot.lane.b32.xlu0 %v1109, 64
    %v1113 = vpop.permute.xlu0 %1112
    %v1115 = vmul.f32 %v1105, %v1113
    %1117 = vrot.lane.b32.xlu0 %v1115, 64
    %v1118 = vpop.permute.xlu0 %1117
    %v1120 = vadd.f32 %v1110, %v1118
    %v1121 = vtanh.pop %v1120
    %1123 = vrot.lane.b32.xlu0 %v1121, 64
    %v1124 = vpop.permute.xlu0 %1123
    %v1126 = vmul.f32 %v1107, %v1124
    %v1128 = vrot.slane %v1015, 6
    %v1129 = vsel %vm233, %v1128, 0
    %1131 = vmatprep.subr.mxu0 0.0
    %1132 = vmatpush1.msra.mxu0 0.0
    %1133 = vmatprep.subr.mxu0 0.0
    %1134 = vmatpush1.msra.mxu0 0.0
    %1135 = vmatprep.subr.mxu0 0.0
    %1136 = vmatpush1.msra.mxu0 0.0
    %1137 = vmatprep.subr.mxu0 0.0
    %1138 = vmatpush1.msra.mxu0 0.0
    %1139 = vmatprep.subr.mxu0 0.0
    %1140 = vmatpush1.msra.mxu0 0.0
    %1141 = vmatprep.subr.mxu0 0.0
    %1142 = vmatpush1.msra.mxu0 0.0
    %1143 = vmatprep.subr.mxu0 0.0
    %1144 = vmatpush1.msra.mxu0 0.0
    %1145 = vmatprep.subr.mxu0 0.0
    %1146 = vmatpush1.msra.mxu0 0.0
    %1147 = vmatprep.subr.mxu0 %v188
    %1148 = vmatpush1.msra.mxu0 %v187
    %1149 = vmatprep.subr.mxu0 %v186
    %1150 = vmatpush1.msra.mxu0 %v185
    %1151 = vmatprep.subr.mxu0 %v184
    %1152 = vmatpush1.msra.mxu0 %v183
    %1153 = vmatprep.subr.mxu0 %v182
    %1154 = vmatpush1.msra.mxu0 %v181
    %1155 = vmatprep.subr.mxu0 %v180
    %1156 = vmatpush1.msra.mxu0 %v179
    %1157 = vmatprep.subr.mxu0 %v178
    %1158 = vmatpush1.msra.mxu0 %v177
    %1159 = vmatprep.subr.mxu0 %v176
    %1160 = vmatpush1.msra.mxu0 %v175
    %1161 = vmatprep.subr.mxu0 %v174
    %1162 = vmatpush1.msra.mxu0 %v173
    %1163 = vmatprep.subr.mxu0 0.0
    %1164 = vmatpush2.msra.mxu0 0.0
    %1165 = vmatprep.subr.mxu0 0.0
    %1166 = vmatpush2.msra.mxu0 0.0
    %1167 = vmatprep.subr.mxu0 0.0
    %1168 = vmatpush2.msra.mxu0 0.0
    %1169 = vmatprep.subr.mxu0 0.0
    %1170 = vmatpush2.msra.mxu0 0.0
    %1171 = vmatprep.subr.mxu0 0.0
    %1172 = vmatpush2.msra.mxu0 0.0
    %1173 = vmatprep.subr.mxu0 0.0
    %1174 = vmatpush2.msra.mxu0 0.0
    %1175 = vmatprep.subr.mxu0 0.0
    %1176 = vmatpush2.msra.mxu0 0.0
    %1177 = vmatprep.subr.mxu0 0.0
    %1178 = vmatpush2.msra.mxu0 0.0
    %1179 = vmatprep.subr.mxu0 0.0
    %1180 = vmatpush2.msra.mxu0 0.0
    %1181 = vmatprep.subr.mxu0 0.0
    %1182 = vmatpush2.msra.mxu0 0.0
    %1183 = vmatprep.subr.mxu0 0.0
    %1184 = vmatpush2.msra.mxu0 0.0
    %1185 = vmatprep.subr.mxu0 0.0
    %1186 = vmatpush2.msra.mxu0 0.0
    %1187 = vmatprep.subr.mxu0 0.0
    %1188 = vmatpush2.msra.mxu0 0.0
    %1189 = vmatprep.subr.mxu0 0.0
    %1190 = vmatpush2.msra.mxu0 0.0
    %1191 = vmatprep.subr.mxu0 0.0
    %1192 = vmatpush2.msra.mxu0 0.0
    %1193 = vmatprep.subr.mxu0 0.0
    %1194 = vmatpush2.msra.mxu0 0.0
    %1195 = vmatprep.mubr.f32.mxu0 0.0
    %1196 = vmatmul.mubr.f32.gmra.mxu0 %v1129
    %v1197 = vpop.f32.mrf.mxu0
    %v1198 = vadd.f32 0.0, %v1197
    %v1199 = vpop.f32.mrf.mxu0
    %v1200 = vadd.f32 0.0, %v1199
    %1201 = vdwg.mxu0
    %v1202 = vadd.f32 %v169, %v1198
    %v1203 = vadd.f32 %v171, %v1200
    %v1204 = vxor.u32 %v1202, 2147483648
    %v1205 = vxor.u32 %v1203, 2147483648
    %v1206 = vmul.f32 %v1204, 1.442695
    %v1207 = vpow.pop %v1206
    %v1208 = vmul.f32 %v1205, 1.442695
    %v1209 = vpow.pop %v1208
    %v1210 = vadd.f32 %v1207, 1.0
    %v1211 = vadd.f32 %v1209, 1.0
    %v1212 = vrcp.pop %v1210
    %v1213 = vmul.f32 1.0, %v1212
    %v1214 = vrcp.pop %v1211
    %v1215 = vmul.f32 1.0, %v1214
    %v1216 = vmul.f32 %v1215, 2.0
    %v1217 = vsub.f32 %v1216, 1.0
    %v1219 = vrot.slane %v1009, 6
    %v1221 = vmul.f32 %v1213, %v1219
    %1223 = vrot.lane.b32.xlu0 %v1217, 64
    %v1224 = vpop.permute.xlu0 %1223
    %v1226 = vmul.f32 %v1213, %v1224
    %1228 = vrot.lane.b32.xlu0 %v1226, 64
    %v1229 = vpop.permute.xlu0 %1228
    %v1231 = vadd.f32 %v1221, %v1229
    %v1232 = vtanh.pop %v1231
    %1234 = vrot.lane.b32.xlu0 %v1232, 64
    %v1235 = vpop.permute.xlu0 %1234
    %v1237 = vmul.f32 %v1215, %v1235
    %1239 = vrot.lane.b32.xlu0 %v1126, 64
    %v1240 = vpop.permute.xlu0 %1239
    %v1242 = vsel %vm233, %v1237, %v1240
    %1243 = vmatprep.subr.mxu0 %v220
    %1244 = vmatpush1.msra.mxu0 %v219
    %1245 = vmatprep.subr.mxu0 %v218
    %1246 = vmatpush1.msra.mxu0 %v217
    %1247 = vmatprep.subr.mxu0 %v216
    %1248 = vmatpush1.msra.mxu0 %v215
    %1249 = vmatprep.subr.mxu0 %v214
    %1250 = vmatpush1.msra.mxu0 %v213
    %1251 = vmatprep.subr.mxu0 %v212
    %1252 = vmatpush1.msra.mxu0 %v211
    %1253 = vmatprep.subr.mxu0 %v210
    %1254 = vmatpush1.msra.mxu0 %v209
    %1255 = vmatprep.subr.mxu0 %v208
    %1256 = vmatpush1.msra.mxu0 %v207
    %1257 = vmatprep.subr.mxu0 %v206
    %1258 = vmatpush1.msra.mxu0 %v205
    %1259 = vmatprep.subr.mxu0 %v204
    %1260 = vmatpush1.msra.mxu0 %v203
    %1261 = vmatprep.subr.mxu0 %v202
    %1262 = vmatpush1.msra.mxu0 %v201
    %1263 = vmatprep.subr.mxu0 %v200
    %1264 = vmatpush1.msra.mxu0 %v199
    %1265 = vmatprep.subr.mxu0 %v198
    %1266 = vmatpush1.msra.mxu0 %v197
    %1267 = vmatprep.subr.mxu0 %v196
    %1268 = vmatpush1.msra.mxu0 %v195
    %1269 = vmatprep.subr.mxu0 %v194
    %1270 = vmatpush1.msra.mxu0 %v193
    %1271 = vmatprep.subr.mxu0 %v192
    %1272 = vmatpush1.msra.mxu0 %v191
    %1273 = vmatprep.subr.mxu0 %v190
    %1274 = vmatpush1.msra.mxu0 %v189
    %1275 = vmatprep.subr.mxu0 0.0
    %1276 = vmatpush2.msra.mxu0 0.0
    %1277 = vmatprep.subr.mxu0 0.0
    %1278 = vmatpush2.msra.mxu0 0.0
    %1279 = vmatprep.subr.mxu0 0.0
    %1280 = vmatpush2.msra.mxu0 0.0
    %1281 = vmatprep.subr.mxu0 0.0
    %1282 = vmatpush2.msra.mxu0 0.0
    %1283 = vmatprep.subr.mxu0 0.0
    %1284 = vmatpush2.msra.mxu0 0.0
    %1285 = vmatprep.subr.mxu0 0.0
    %1286 = vmatpush2.msra.mxu0 0.0
    %1287 = vmatprep.subr.mxu0 0.0
    %1288 = vmatpush2.msra.mxu0 0.0
    %1289 = vmatprep.subr.mxu0 0.0
    %1290 = vmatpush2.msra.mxu0 0.0
    %1291 = vmatprep.subr.mxu0 0.0
    %1292 = vmatpush2.msra.mxu0 0.0
    %1293 = vmatprep.subr.mxu0 0.0
    %1294 = vmatpush2.msra.mxu0 0.0
    %1295 = vmatprep.subr.mxu0 0.0
    %1296 = vmatpush2.msra.mxu0 0.0
    %1297 = vmatprep.subr.mxu0 0.0
    %1298 = vmatpush2.msra.mxu0 0.0
    %1299 = vmatprep.subr.mxu0 0.0
    %1300 = vmatpush2.msra.mxu0 0.0
    %1301 = vmatprep.subr.mxu0 0.0
    %1302 = vmatpush2.msra.mxu0 0.0
    %1303 = vmatprep.subr.mxu0 0.0
    %1304 = vmatpush2.msra.mxu0 0.0
    %1305 = vmatprep.subr.mxu0 0.0
    %1306 = vmatpush2.msra.mxu0 0.0
    %1307 = vmatprep.mubr.f32.mxu0 0.0
    %1308 = vmatmul.mubr.f32.gmra.mxu0 %v1242
    %v1309 = vpop.f32.mrf.mxu0
    %v1310 = vadd.f32 %v226, %v1309
    %v1311 = vpop.f32.mrf.mxu0
    %v1312 = vadd.f32 %v230, %v1311
    %1313 = vdwg.mxu0
    %v1314 = vxor.u32 %v1310, 2147483648
    %v1315 = vxor.u32 %v1312, 2147483648
    %v1316 = vmul.f32 %v1314, 1.442695
    %v1317 = vpow.pop %v1316
    %v1318 = vmul.f32 %v1315, 1.442695
    %v1319 = vpow.pop %v1318
    %v1320 = vadd.f32 %v1317, 1.0
    %v1321 = vadd.f32 %v1319, 1.0
    %v1322 = vrcp.pop %v1320
    %v1323 = vmul.f32 1.0, %v1322
    %v1324 = vrcp.pop %v1321
    %v1325 = vmul.f32 1.0, %v1324
    %v1326 = vmul.f32 %v1325, 2.0
    %v1327 = vsub.f32 %v1326, 1.0
    %v1328 = vmul.f32 %v1323, %v1120
    %1330 = vrot.lane.b32.xlu0 %v1327, 64
    %v1331 = vpop.permute.xlu0 %1330
    %v1333 = vmul.f32 %v1323, %v1331
    %1335 = vrot.lane.b32.xlu0 %v1333, 64
    %v1336 = vpop.permute.xlu0 %1335
    %v1338 = vadd.f32 %v1328, %v1336
    %v1339 = vtanh.pop %v1338
    %1341 = vrot.lane.b32.xlu0 %v1339, 64
    %v1342 = vpop.permute.xlu0 %1341
    %v1344 = vmul.f32 %v1325, %v1342
    %v1346 = vsel %vm233, %v1237, 0
    %1348 = vmatprep.subr.mxu0 0.0
    %1349 = vmatpush1.msra.mxu0 0.0
    %1350 = vmatprep.subr.mxu0 0.0
    %1351 = vmatpush1.msra.mxu0 0.0
    %1352 = vmatprep.subr.mxu0 0.0
    %1353 = vmatpush1.msra.mxu0 0.0
    %1354 = vmatprep.subr.mxu0 0.0
    %1355 = vmatpush1.msra.mxu0 0.0
    %1356 = vmatprep.subr.mxu0 0.0
    %1357 = vmatpush1.msra.mxu0 0.0
    %1358 = vmatprep.subr.mxu0 0.0
    %1359 = vmatpush1.msra.mxu0 0.0
    %1360 = vmatprep.subr.mxu0 0.0
    %1361 = vmatpush1.msra.mxu0 0.0
    %1362 = vmatprep.subr.mxu0 0.0
    %1363 = vmatpush1.msra.mxu0 0.0
    %1364 = vmatprep.subr.mxu0 %v188
    %1365 = vmatpush1.msra.mxu0 %v187
    %1366 = vmatprep.subr.mxu0 %v186
    %1367 = vmatpush1.msra.mxu0 %v185
    %1368 = vmatprep.subr.mxu0 %v184
    %1369 = vmatpush1.msra.mxu0 %v183
    %1370 = vmatprep.subr.mxu0 %v182
    %1371 = vmatpush1.msra.mxu0 %v181
    %1372 = vmatprep.subr.mxu0 %v180
    %1373 = vmatpush1.msra.mxu0 %v179
    %1374 = vmatprep.subr.mxu0 %v178
    %1375 = vmatpush1.msra.mxu0 %v177
    %1376 = vmatprep.subr.mxu0 %v176
    %1377 = vmatpush1.msra.mxu0 %v175
    %1378 = vmatprep.subr.mxu0 %v174
    %1379 = vmatpush1.msra.mxu0 %v173
    %1380 = vmatprep.subr.mxu0 0.0
    %1381 = vmatpush2.msra.mxu0 0.0
    %1382 = vmatprep.subr.mxu0 0.0
    %1383 = vmatpush2.msra.mxu0 0.0
    %1384 = vmatprep.subr.mxu0 0.0
    %1385 = vmatpush2.msra.mxu0 0.0
    %1386 = vmatprep.subr.mxu0 0.0
    %1387 = vmatpush2.msra.mxu0 0.0
    %1388 = vmatprep.subr.mxu0 0.0
    %1389 = vmatpush2.msra.mxu0 0.0
    %1390 = vmatprep.subr.mxu0 0.0
    %1391 = vmatpush2.msra.mxu0 0.0
    %1392 = vmatprep.subr.mxu0 0.0
    %1393 = vmatpush2.msra.mxu0 0.0
    %1394 = vmatprep.subr.mxu0 0.0
    %1395 = vmatpush2.msra.mxu0 0.0
    %1396 = vmatprep.subr.mxu0 0.0
    %1397 = vmatpush2.msra.mxu0 0.0
    %1398 = vmatprep.subr.mxu0 0.0
    %1399 = vmatpush2.msra.mxu0 0.0
    %1400 = vmatprep.subr.mxu0 0.0
    %1401 = vmatpush2.msra.mxu0 0.0
    %1402 = vmatprep.subr.mxu0 0.0
    %1403 = vmatpush2.msra.mxu0 0.0
    %1404 = vmatprep.subr.mxu0 0.0
    %1405 = vmatpush2.msra.mxu0 0.0
    %1406 = vmatprep.subr.mxu0 0.0
    %1407 = vmatpush2.msra.mxu0 0.0
    %1408 = vmatprep.subr.mxu0 0.0
    %1409 = vmatpush2.msra.mxu0 0.0
    %1410 = vmatprep.subr.mxu0 0.0
    %1411 = vmatpush2.msra.mxu0 0.0
    %1412 = vmatprep.mubr.f32.mxu0 0.0
    %1413 = vmatmul.mubr.f32.gmra.mxu0 %v1346
    %v1414 = vpop.f32.mrf.mxu0
    %v1415 = vadd.f32 0.0, %v1414
    %v1416 = vpop.f32.mrf.mxu0
    %v1417 = vadd.f32 0.0, %v1416
    %1418 = vdwg.mxu0
    %v1421 = vrot.slane %v1415, 6
    %v1422 = vrot.slane %v1417, 6
    %v1425 = vadd.f32 %v169, %v1421
    %v1426 = vadd.f32 %v171, %v1422
    %v1427 = vxor.u32 %v1425, 2147483648
    %v1428 = vxor.u32 %v1426, 2147483648
    %v1429 = vmul.f32 %v1427, 1.442695
    %v1430 = vpow.pop %v1429
    %v1431 = vmul.f32 %v1428, 1.442695
    %v1432 = vpow.pop %v1431
    %v1433 = vadd.f32 %v1430, 1.0
    %v1434 = vadd.f32 %v1432, 1.0
    %v1435 = vrcp.pop %v1433
    %v1436 = vmul.f32 1.0, %v1435
    %v1437 = vrcp.pop %v1434
    %v1438 = vmul.f32 1.0, %v1437
    %v1439 = vmul.f32 %v1438, 2.0
    %v1440 = vsub.f32 %v1439, 1.0
    %v1442 = vrot.slane %v1231, 6
    %v1444 = vmul.f32 %v1436, %v1442
    %1446 = vrot.lane.b32.xlu0 %v1440, 64
    %v1447 = vpop.permute.xlu0 %1446
    %v1449 = vmul.f32 %v1436, %v1447
    %1451 = vrot.lane.b32.xlu0 %v1449, 64
    %v1452 = vpop.permute.xlu0 %1451
    %v1454 = vadd.f32 %v1444, %v1452
    %v1455 = vtanh.pop %v1454
    %1457 = vrot.lane.b32.xlu0 %v1455, 64
    %v1458 = vpop.permute.xlu0 %1457
    %v1460 = vmul.f32 %v1438, %v1458
    %v1462 = vrot.slane %v1344, 6
    %1463 = vrot.lane.b32.xlu0 %v1462, 64
    %v1464 = vpop.permute.xlu0 %1463
    %v1466 = vsel %vm233, %v1460, %v1464
    %v1468 = vrot.slane %v1466, 2
    %1470 = vmatprep.subr.mxu0 %v220
    %1471 = vmatpush1.msra.mxu0 %v219
    %1472 = vmatprep.subr.mxu0 %v218
    %1473 = vmatpush1.msra.mxu0 %v217
    %1474 = vmatprep.subr.mxu0 %v216
    %1475 = vmatpush1.msra.mxu0 %v215
    %1476 = vmatprep.subr.mxu0 %v214
    %1477 = vmatpush1.msra.mxu0 %v213
    %1478 = vmatprep.subr.mxu0 %v212
    %1479 = vmatpush1.msra.mxu0 %v211
    %1480 = vmatprep.subr.mxu0 %v210
    %1481 = vmatpush1.msra.mxu0 %v209
    %1482 = vmatprep.subr.mxu0 %v208
    %1483 = vmatpush1.msra.mxu0 %v207
    %1484 = vmatprep.subr.mxu0 %v206
    %1485 = vmatpush1.msra.mxu0 %v205
    %1486 = vmatprep.subr.mxu0 %v204
    %1487 = vmatpush1.msra.mxu0 %v203
    %1488 = vmatprep.subr.mxu0 %v202
    %1489 = vmatpush1.msra.mxu0 %v201
    %1490 = vmatprep.subr.mxu0 %v200
    %1491 = vmatpush1.msra.mxu0 %v199
    %1492 = vmatprep.subr.mxu0 %v198
    %1493 = vmatpush1.msra.mxu0 %v197
    %1494 = vmatprep.subr.mxu0 %v196
    %1495 = vmatpush1.msra.mxu0 %v195
    %1496 = vmatprep.subr.mxu0 %v194
    %1497 = vmatpush1.msra.mxu0 %v193
    %1498 = vmatprep.subr.mxu0 %v192
    %1499 = vmatpush1.msra.mxu0 %v191
    %1500 = vmatprep.subr.mxu0 %v190
    %1501 = vmatpush1.msra.mxu0 %v189
    %1502 = vmatprep.subr.mxu0 0.0
    %1503 = vmatpush2.msra.mxu0 0.0
    %1504 = vmatprep.subr.mxu0 0.0
    %1505 = vmatpush2.msra.mxu0 0.0
    %1506 = vmatprep.subr.mxu0 0.0
    %1507 = vmatpush2.msra.mxu0 0.0
    %1508 = vmatprep.subr.mxu0 0.0
    %1509 = vmatpush2.msra.mxu0 0.0
    %1510 = vmatprep.subr.mxu0 0.0
    %1511 = vmatpush2.msra.mxu0 0.0
    %1512 = vmatprep.subr.mxu0 0.0
    %1513 = vmatpush2.msra.mxu0 0.0
    %1514 = vmatprep.subr.mxu0 0.0
    %1515 = vmatpush2.msra.mxu0 0.0
    %1516 = vmatprep.subr.mxu0 0.0
    %1517 = vmatpush2.msra.mxu0 0.0
    %1518 = vmatprep.subr.mxu0 0.0
    %1519 = vmatpush2.msra.mxu0 0.0
    %1520 = vmatprep.subr.mxu0 0.0
    %1521 = vmatpush2.msra.mxu0 0.0
    %1522 = vmatprep.subr.mxu0 0.0
    %1523 = vmatpush2.msra.mxu0 0.0
    %1524 = vmatprep.subr.mxu0 0.0
    %1525 = vmatpush2.msra.mxu0 0.0
    %1526 = vmatprep.subr.mxu0 0.0
    %1527 = vmatpush2.msra.mxu0 0.0
    %1528 = vmatprep.subr.mxu0 0.0
    %1529 = vmatpush2.msra.mxu0 0.0
    %1530 = vmatprep.subr.mxu0 0.0
    %1531 = vmatpush2.msra.mxu0 0.0
    %1532 = vmatprep.subr.mxu0 0.0
    %1533 = vmatpush2.msra.mxu0 0.0
    %1534 = vmatprep.mubr.f32.mxu0 0.0
    %1535 = vmatmul.mubr.f32.gmra.mxu0 %v1468
    %v1536 = vpop.f32.mrf.mxu0
    %v1537 = vadd.f32 %v226, %v1536
    %v1538 = vpop.f32.mrf.mxu0
    %v1539 = vadd.f32 %v230, %v1538
    %1540 = vdwg.mxu0
    %v1541 = vxor.u32 %v1537, 2147483648
    %v1542 = vxor.u32 %v1539, 2147483648
    %v1543 = vmul.f32 %v1541, 1.442695
    %v1544 = vpow.pop %v1543
    %v1545 = vmul.f32 %v1542, 1.442695
    %v1546 = vpow.pop %v1545
    %v1547 = vadd.f32 %v1544, 1.0
    %v1548 = vadd.f32 %v1546, 1.0
    %v1549 = vrcp.pop %v1547
    %v1550 = vmul.f32 1.0, %v1549
    %v1551 = vrcp.pop %v1548
    %v1552 = vmul.f32 1.0, %v1551
    %v1553 = vmul.f32 %v1552, 2.0
    %v1554 = vsub.f32 %v1553, 1.0
    %v1555 = vmul.f32 %v1550, %v1338
    %1557 = vrot.lane.b32.xlu0 %v1554, 64
    %v1558 = vpop.permute.xlu0 %1557
    %v1560 = vmul.f32 %v1550, %v1558
    %1562 = vrot.lane.b32.xlu0 %v1560, 64
    %v1563 = vpop.permute.xlu0 %1562
    %v1565 = vadd.f32 %v1555, %v1563
    %v1566 = vtanh.pop %v1565
    %1568 = vrot.lane.b32.xlu0 %v1566, 64
    %v1569 = vpop.permute.xlu0 %1568
    %v1571 = vmul.f32 %v1552, %v1569
    %v1573 = vrot.slane %v1460, 2
    %v1574 = vsel %vm233, %v1573, 0
    %1576 = vmatprep.subr.mxu0 0.0
    %1577 = vmatpush1.msra.mxu0 0.0
    %1578 = vmatprep.subr.mxu0 0.0
    %1579 = vmatpush1.msra.mxu0 0.0
    %1580 = vmatprep.subr.mxu0 0.0
    %1581 = vmatpush1.msra.mxu0 0.0
    %1582 = vmatprep.subr.mxu0 0.0
    %1583 = vmatpush1.msra.mxu0 0.0
    %1584 = vmatprep.subr.mxu0 0.0
    %1585 = vmatpush1.msra.mxu0 0.0
    %1586 = vmatprep.subr.mxu0 0.0
    %1587 = vmatpush1.msra.mxu0 0.0
    %1588 = vmatprep.subr.mxu0 0.0
    %1589 = vmatpush1.msra.mxu0 0.0
    %1590 = vmatprep.subr.mxu0 0.0
    %1591 = vmatpush1.msra.mxu0 0.0
    %1592 = vmatprep.subr.mxu0 %v188
    %1593 = vmatpush1.msra.mxu0 %v187
    %1594 = vmatprep.subr.mxu0 %v186
    %1595 = vmatpush1.msra.mxu0 %v185
    %1596 = vmatprep.subr.mxu0 %v184
    %1597 = vmatpush1.msra.mxu0 %v183
    %1598 = vmatprep.subr.mxu0 %v182
    %1599 = vmatpush1.msra.mxu0 %v181
    %1600 = vmatprep.subr.mxu0 %v180
    %1601 = vmatpush1.msra.mxu0 %v179
    %1602 = vmatprep.subr.mxu0 %v178
    %1603 = vmatpush1.msra.mxu0 %v177
    %1604 = vmatprep.subr.mxu0 %v176
    %1605 = vmatpush1.msra.mxu0 %v175
    %1606 = vmatprep.subr.mxu0 %v174
    %1607 = vmatpush1.msra.mxu0 %v173
    %1608 = vmatprep.subr.mxu0 0.0
    %1609 = vmatpush2.msra.mxu0 0.0
    %1610 = vmatprep.subr.mxu0 0.0
    %1611 = vmatpush2.msra.mxu0 0.0
    %1612 = vmatprep.subr.mxu0 0.0
    %1613 = vmatpush2.msra.mxu0 0.0
    %1614 = vmatprep.subr.mxu0 0.0
    %1615 = vmatpush2.msra.mxu0 0.0
    %1616 = vmatprep.subr.mxu0 0.0
    %1617 = vmatpush2.msra.mxu0 0.0
    %1618 = vmatprep.subr.mxu0 0.0
    %1619 = vmatpush2.msra.mxu0 0.0
    %1620 = vmatprep.subr.mxu0 0.0
    %1621 = vmatpush2.msra.mxu0 0.0
    %1622 = vmatprep.subr.mxu0 0.0
    %1623 = vmatpush2.msra.mxu0 0.0
    %1624 = vmatprep.subr.mxu0 0.0
    %1625 = vmatpush2.msra.mxu0 0.0
    %1626 = vmatprep.subr.mxu0 0.0
    %1627 = vmatpush2.msra.mxu0 0.0
    %1628 = vmatprep.subr.mxu0 0.0
    %1629 = vmatpush2.msra.mxu0 0.0
    %1630 = vmatprep.subr.mxu0 0.0
    %1631 = vmatpush2.msra.mxu0 0.0
    %1632 = vmatprep.subr.mxu0 0.0
    %1633 = vmatpush2.msra.mxu0 0.0
    %1634 = vmatprep.subr.mxu0 0.0
    %1635 = vmatpush2.msra.mxu0 0.0
    %1636 = vmatprep.subr.mxu0 0.0
    %1637 = vmatpush2.msra.mxu0 0.0
    %1638 = vmatprep.subr.mxu0 0.0
    %1639 = vmatpush2.msra.mxu0 0.0
    %1640 = vmatprep.mubr.f32.mxu0 0.0
    %1641 = vmatmul.mubr.f32.gmra.mxu0 %v1574
    %v1642 = vpop.f32.mrf.mxu0
    %v1643 = vadd.f32 0.0, %v1642
    %v1644 = vpop.f32.mrf.mxu0
    %v1645 = vadd.f32 0.0, %v1644
    %1646 = vdwg.mxu0
    %v1649 = vrot.slane %v1643, 4
    %v1650 = vrot.slane %v1645, 4
    %v1653 = vadd.f32 %v169, %v1649
    %v1654 = vadd.f32 %v171, %v1650
    %v1655 = vxor.u32 %v1653, 2147483648
    %v1656 = vxor.u32 %v1654, 2147483648
    %v1657 = vmul.f32 %v1655, 1.442695
    %v1658 = vpow.pop %v1657
    %v1659 = vmul.f32 %v1656, 1.442695
    %v1660 = vpow.pop %v1659
    %v1661 = vadd.f32 %v1658, 1.0
    %v1662 = vadd.f32 %v1660, 1.0
    %v1663 = vrcp.pop %v1661
    %v1664 = vmul.f32 1.0, %v1663
    %v1665 = vrcp.pop %v1662
    %v1666 = vmul.f32 1.0, %v1665
    %v1667 = vmul.f32 %v1666, 2.0
    %v1668 = vsub.f32 %v1667, 1.0
    %v1670 = vrot.slane %v1454, 6
    %v1672 = vmul.f32 %v1664, %v1670
    %1674 = vrot.lane.b32.xlu0 %v1668, 64
    %v1675 = vpop.permute.xlu0 %1674
    %v1677 = vmul.f32 %v1664, %v1675
    %1679 = vrot.lane.b32.xlu0 %v1677, 64
    %v1680 = vpop.permute.xlu0 %1679
    %v1682 = vadd.f32 %v1672, %v1680
    %v1683 = vtanh.pop %v1682
    %1685 = vrot.lane.b32.xlu0 %v1683, 64
    %v1686 = vpop.permute.xlu0 %1685
    %v1688 = vmul.f32 %v1666, %v1686
    %v1690 = vrot.slane %v1571, 4
    %1691 = vrot.lane.b32.xlu0 %v1690, 64
    %v1692 = vpop.permute.xlu0 %1691
    %v1694 = vsel %vm233, %v1688, %v1692
    %v1696 = vrot.slane %v1694, 4
    %1698 = vmatprep.subr.mxu0 %v220
    %1699 = vmatpush1.msra.mxu0 %v219
    %1700 = vmatprep.subr.mxu0 %v218
    %1701 = vmatpush1.msra.mxu0 %v217
    %1702 = vmatprep.subr.mxu0 %v216
    %1703 = vmatpush1.msra.mxu0 %v215
    %1704 = vmatprep.subr.mxu0 %v214
    %1705 = vmatpush1.msra.mxu0 %v213
    %1706 = vmatprep.subr.mxu0 %v212
    %1707 = vmatpush1.msra.mxu0 %v211
    %1708 = vmatprep.subr.mxu0 %v210
    %1709 = vmatpush1.msra.mxu0 %v209
    %1710 = vmatprep.subr.mxu0 %v208
    %1711 = vmatpush1.msra.mxu0 %v207
    %1712 = vmatprep.subr.mxu0 %v206
    %1713 = vmatpush1.msra.mxu0 %v205
    %1714 = vmatprep.subr.mxu0 %v204
    %1715 = vmatpush1.msra.mxu0 %v203
    %1716 = vmatprep.subr.mxu0 %v202
    %1717 = vmatpush1.msra.mxu0 %v201
    %1718 = vmatprep.subr.mxu0 %v200
    %1719 = vmatpush1.msra.mxu0 %v199
    %1720 = vmatprep.subr.mxu0 %v198
    %1721 = vmatpush1.msra.mxu0 %v197
    %1722 = vmatprep.subr.mxu0 %v196
    %1723 = vmatpush1.msra.mxu0 %v195
    %1724 = vmatprep.subr.mxu0 %v194
    %1725 = vmatpush1.msra.mxu0 %v193
    %1726 = vmatprep.subr.mxu0 %v192
    %1727 = vmatpush1.msra.mxu0 %v191
    %1728 = vmatprep.subr.mxu0 %v190
    %1729 = vmatpush1.msra.mxu0 %v189
    %1730 = vmatprep.subr.mxu0 0.0
    %1731 = vmatpush2.msra.mxu0 0.0
    %1732 = vmatprep.subr.mxu0 0.0
    %1733 = vmatpush2.msra.mxu0 0.0
    %1734 = vmatprep.subr.mxu0 0.0
    %1735 = vmatpush2.msra.mxu0 0.0
    %1736 = vmatprep.subr.mxu0 0.0
    %1737 = vmatpush2.msra.mxu0 0.0
    %1738 = vmatprep.subr.mxu0 0.0
    %1739 = vmatpush2.msra.mxu0 0.0
    %1740 = vmatprep.subr.mxu0 0.0
    %1741 = vmatpush2.msra.mxu0 0.0
    %1742 = vmatprep.subr.mxu0 0.0
    %1743 = vmatpush2.msra.mxu0 0.0
    %1744 = vmatprep.subr.mxu0 0.0
    %1745 = vmatpush2.msra.mxu0 0.0
    %1746 = vmatprep.subr.mxu0 0.0
    %1747 = vmatpush2.msra.mxu0 0.0
    %1748 = vmatprep.subr.mxu0 0.0
    %1749 = vmatpush2.msra.mxu0 0.0
    %1750 = vmatprep.subr.mxu0 0.0
    %1751 = vmatpush2.msra.mxu0 0.0
    %1752 = vmatprep.subr.mxu0 0.0
    %1753 = vmatpush2.msra.mxu0 0.0
    %1754 = vmatprep.subr.mxu0 0.0
    %1755 = vmatpush2.msra.mxu0 0.0
    %1756 = vmatprep.subr.mxu0 0.0
    %1757 = vmatpush2.msra.mxu0 0.0
    %1758 = vmatprep.subr.mxu0 0.0
    %1759 = vmatpush2.msra.mxu0 0.0
    %1760 = vmatprep.subr.mxu0 0.0
    %1761 = vmatpush2.msra.mxu0 0.0
    %1762 = vmatprep.mubr.f32.mxu0 0.0
    %1763 = vmatmul.mubr.f32.gmra.mxu0 %v1696
    %v1764 = vpop.f32.mrf.mxu0
    %v1765 = vadd.f32 %v226, %v1764
    %v1766 = vpop.f32.mrf.mxu0
    %v1767 = vadd.f32 %v230, %v1766
    %1768 = vdwg.mxu0
    %v1769 = vxor.u32 %v1765, 2147483648
    %v1770 = vxor.u32 %v1767, 2147483648
    %v1771 = vmul.f32 %v1769, 1.442695
    %v1772 = vpow.pop %v1771
    %v1773 = vmul.f32 %v1770, 1.442695
    %v1774 = vpow.pop %v1773
    %v1775 = vadd.f32 %v1772, 1.0
    %v1776 = vadd.f32 %v1774, 1.0
    %v1777 = vrcp.pop %v1775
    %v1778 = vmul.f32 1.0, %v1777
    %v1779 = vrcp.pop %v1776
    %v1780 = vmul.f32 1.0, %v1779
    %v1781 = vmul.f32 %v1780, 2.0
    %v1782 = vsub.f32 %v1781, 1.0
    %v1783 = vmul.f32 %v1778, %v1565
    %1785 = vrot.lane.b32.xlu0 %v1782, 64
    %v1786 = vpop.permute.xlu0 %1785
    %v1788 = vmul.f32 %v1778, %v1786
    %1790 = vrot.lane.b32.xlu0 %v1788, 64
    %v1791 = vpop.permute.xlu0 %1790
    %v1793 = vadd.f32 %v1783, %v1791
    %v1794 = vtanh.pop %v1793
    %1796 = vrot.lane.b32.xlu0 %v1794, 64
    %v1797 = vpop.permute.xlu0 %1796
    %v1799 = vmul.f32 %v1780, %v1797
    %v1801 = vrot.slane %v1688, 4
    %v1802 = vsel %vm233, %v1801, 0
    %1804 = vmatprep.subr.mxu0 0.0
    %1805 = vmatpush1.msra.mxu0 0.0
    %1806 = vmatprep.subr.mxu0 0.0
    %1807 = vmatpush1.msra.mxu0 0.0
    %1808 = vmatprep.subr.mxu0 0.0
    %1809 = vmatpush1.msra.mxu0 0.0
    %1810 = vmatprep.subr.mxu0 0.0
    %1811 = vmatpush1.msra.mxu0 0.0
    %1812 = vmatprep.subr.mxu0 0.0
    %1813 = vmatpush1.msra.mxu0 0.0
    %1814 = vmatprep.subr.mxu0 0.0
    %1815 = vmatpush1.msra.mxu0 0.0
    %1816 = vmatprep.subr.mxu0 0.0
    %1817 = vmatpush1.msra.mxu0 0.0
    %1818 = vmatprep.subr.mxu0 0.0
    %1819 = vmatpush1.msra.mxu0 0.0
    %1820 = vmatprep.subr.mxu0 %v188
    %1821 = vmatpush1.msra.mxu0 %v187
    %1822 = vmatprep.subr.mxu0 %v186
    %1823 = vmatpush1.msra.mxu0 %v185
    %1824 = vmatprep.subr.mxu0 %v184
    %1825 = vmatpush1.msra.mxu0 %v183
    %1826 = vmatprep.subr.mxu0 %v182
    %1827 = vmatpush1.msra.mxu0 %v181
    %1828 = vmatprep.subr.mxu0 %v180
    %1829 = vmatpush1.msra.mxu0 %v179
    %1830 = vmatprep.subr.mxu0 %v178
    %1831 = vmatpush1.msra.mxu0 %v177
    %1832 = vmatprep.subr.mxu0 %v176
    %1833 = vmatpush1.msra.mxu0 %v175
    %1834 = vmatprep.subr.mxu0 %v174
    %1835 = vmatpush1.msra.mxu0 %v173
    %1836 = vmatprep.subr.mxu0 0.0
    %1837 = vmatpush2.msra.mxu0 0.0
    %1838 = vmatprep.subr.mxu0 0.0
    %1839 = vmatpush2.msra.mxu0 0.0
    %1840 = vmatprep.subr.mxu0 0.0
    %1841 = vmatpush2.msra.mxu0 0.0
    %1842 = vmatprep.subr.mxu0 0.0
    %1843 = vmatpush2.msra.mxu0 0.0
    %1844 = vmatprep.subr.mxu0 0.0
    %1845 = vmatpush2.msra.mxu0 0.0
    %1846 = vmatprep.subr.mxu0 0.0
    %1847 = vmatpush2.msra.mxu0 0.0
    %1848 = vmatprep.subr.mxu0 0.0
    %1849 = vmatpush2.msra.mxu0 0.0
    %1850 = vmatprep.subr.mxu0 0.0
    %1851 = vmatpush2.msra.mxu0 0.0
    %1852 = vmatprep.subr.mxu0 0.0
    %1853 = vmatpush2.msra.mxu0 0.0
    %1854 = vmatprep.subr.mxu0 0.0
    %1855 = vmatpush2.msra.mxu0 0.0
    %1856 = vmatprep.subr.mxu0 0.0
    %1857 = vmatpush2.msra.mxu0 0.0
    %1858 = vmatprep.subr.mxu0 0.0
    %1859 = vmatpush2.msra.mxu0 0.0
    %1860 = vmatprep.subr.mxu0 0.0
    %1861 = vmatpush2.msra.mxu0 0.0
    %1862 = vmatprep.subr.mxu0 0.0
    %1863 = vmatpush2.msra.mxu0 0.0
    %1864 = vmatprep.subr.mxu0 0.0
    %1865 = vmatpush2.msra.mxu0 0.0
    %1866 = vmatprep.subr.mxu0 0.0
    %1867 = vmatpush2.msra.mxu0 0.0
    %1868 = vmatprep.mubr.f32.mxu0 0.0
    %1869 = vmatmul.mubr.f32.gmra.mxu0 %v1802
    %v1870 = vpop.f32.mrf.mxu0
    %v1871 = vadd.f32 0.0, %v1870
    %v1872 = vpop.f32.mrf.mxu0
    %v1873 = vadd.f32 0.0, %v1872
    %1874 = vdwg.mxu0
    %v1877 = vrot.slane %v1871, 2
    %v1878 = vrot.slane %v1873, 2
    %v1881 = vadd.f32 %v169, %v1877
    %v1882 = vadd.f32 %v171, %v1878
    %v1883 = vxor.u32 %v1881, 2147483648
    %v1884 = vxor.u32 %v1882, 2147483648
    %v1885 = vmul.f32 %v1883, 1.442695
    %v1886 = vpow.pop %v1885
    %v1887 = vmul.f32 %v1884, 1.442695
    %v1888 = vpow.pop %v1887
    %v1889 = vadd.f32 %v1886, 1.0
    %v1890 = vadd.f32 %v1888, 1.0
    %v1891 = vrcp.pop %v1889
    %v1892 = vmul.f32 1.0, %v1891
    %v1893 = vrcp.pop %v1890
    %v1894 = vmul.f32 1.0, %v1893
    %v1895 = vmul.f32 %v1894, 2.0
    %v1896 = vsub.f32 %v1895, 1.0
    %v1898 = vrot.slane %v1682, 6
    %v1900 = vmul.f32 %v1892, %v1898
    %1902 = vrot.lane.b32.xlu0 %v1896, 64
    %v1903 = vpop.permute.xlu0 %1902
    %v1905 = vmul.f32 %v1892, %v1903
    %1907 = vrot.lane.b32.xlu0 %v1905, 64
    %v1908 = vpop.permute.xlu0 %1907
    %v1910 = vadd.f32 %v1900, %v1908
    %v1911 = vtanh.pop %v1910
    %1913 = vrot.lane.b32.xlu0 %v1911, 64
    %v1914 = vpop.permute.xlu0 %1913
    %v1916 = vmul.f32 %v1894, %v1914
    %v1918 = vrot.slane %v1799, 2
    %1919 = vrot.lane.b32.xlu0 %v1918, 64
    %v1920 = vpop.permute.xlu0 %1919
    %v1922 = vsel %vm233, %v1916, %v1920
    %v1924 = vrot.slane %v1922, 6
    %1926 = vmatprep.subr.mxu0 %v220
    %1927 = vmatpush1.msra.mxu0 %v219
    %1928 = vmatprep.subr.mxu0 %v218
    %1929 = vmatpush1.msra.mxu0 %v217
    %1930 = vmatprep.subr.mxu0 %v216
    %1931 = vmatpush1.msra.mxu0 %v215
    %1932 = vmatprep.subr.mxu0 %v214
    %1933 = vmatpush1.msra.mxu0 %v213
    %1934 = vmatprep.subr.mxu0 %v212
    %1935 = vmatpush1.msra.mxu0 %v211
    %1936 = vmatprep.subr.mxu0 %v210
    %1937 = vmatpush1.msra.mxu0 %v209
    %1938 = vmatprep.subr.mxu0 %v208
    %1939 = vmatpush1.msra.mxu0 %v207
    %1940 = vmatprep.subr.mxu0 %v206
    %1941 = vmatpush1.msra.mxu0 %v205
    %1942 = vmatprep.subr.mxu0 %v204
    %1943 = vmatpush1.msra.mxu0 %v203
    %1944 = vmatprep.subr.mxu0 %v202
    %1945 = vmatpush1.msra.mxu0 %v201
    %1946 = vmatprep.subr.mxu0 %v200
    %1947 = vmatpush1.msra.mxu0 %v199
    %1948 = vmatprep.subr.mxu0 %v198
    %1949 = vmatpush1.msra.mxu0 %v197
    %1950 = vmatprep.subr.mxu0 %v196
    %1951 = vmatpush1.msra.mxu0 %v195
    %1952 = vmatprep.subr.mxu0 %v194
    %1953 = vmatpush1.msra.mxu0 %v193
    %1954 = vmatprep.subr.mxu0 %v192
    %1955 = vmatpush1.msra.mxu0 %v191
    %1956 = vmatprep.subr.mxu0 %v190
    %1957 = vmatpush1.msra.mxu0 %v189
    %1958 = vmatprep.subr.mxu0 0.0
    %1959 = vmatpush2.msra.mxu0 0.0
    %1960 = vmatprep.subr.mxu0 0.0
    %1961 = vmatpush2.msra.mxu0 0.0
    %1962 = vmatprep.subr.mxu0 0.0
    %1963 = vmatpush2.msra.mxu0 0.0
    %1964 = vmatprep.subr.mxu0 0.0
    %1965 = vmatpush2.msra.mxu0 0.0
    %1966 = vmatprep.subr.mxu0 0.0
    %1967 = vmatpush2.msra.mxu0 0.0
    %1968 = vmatprep.subr.mxu0 0.0
    %1969 = vmatpush2.msra.mxu0 0.0
    %1970 = vmatprep.subr.mxu0 0.0
    %1971 = vmatpush2.msra.mxu0 0.0
    %1972 = vmatprep.subr.mxu0 0.0
    %1973 = vmatpush2.msra.mxu0 0.0
    %1974 = vmatprep.subr.mxu0 0.0
    %1975 = vmatpush2.msra.mxu0 0.0
    %1976 = vmatprep.subr.mxu0 0.0
    %1977 = vmatpush2.msra.mxu0 0.0
    %1978 = vmatprep.subr.mxu0 0.0
    %1979 = vmatpush2.msra.mxu0 0.0
    %1980 = vmatprep.subr.mxu0 0.0
    %1981 = vmatpush2.msra.mxu0 0.0
    %1982 = vmatprep.subr.mxu0 0.0
    %1983 = vmatpush2.msra.mxu0 0.0
    %1984 = vmatprep.subr.mxu0 0.0
    %1985 = vmatpush2.msra.mxu0 0.0
    %1986 = vmatprep.subr.mxu0 0.0
    %1987 = vmatpush2.msra.mxu0 0.0
    %1988 = vmatprep.subr.mxu0 0.0
    %1989 = vmatpush2.msra.mxu0 0.0
    %1990 = vmatprep.mubr.f32.mxu0 0.0
    %1991 = vmatmul.mubr.f32.gmra.mxu0 %v1924
    %v1992 = vpop.f32.mrf.mxu0
    %v1993 = vadd.f32 %v226, %v1992
    %v1994 = vpop.f32.mrf.mxu0
    %v1995 = vadd.f32 %v230, %v1994
    %1996 = vdwg.mxu0
    %v1997 = vxor.u32 %v1993, 2147483648
    %v1998 = vxor.u32 %v1995, 2147483648
    %v1999 = vmul.f32 %v1997, 1.442695
    %v2000 = vpow.pop %v1999
    %v2001 = vmul.f32 %v1998, 1.442695
    %v2002 = vpow.pop %v2001
    %v2003 = vadd.f32 %v2000, 1.0
    %v2004 = vadd.f32 %v2002, 1.0
    %v2005 = vrcp.pop %v2003
    %v2006 = vmul.f32 1.0, %v2005
    %v2007 = vrcp.pop %v2004
    %v2008 = vmul.f32 1.0, %v2007
    %v2009 = vmul.f32 %v2008, 2.0
    %v2010 = vsub.f32 %v2009, 1.0
    %v2011 = vmul.f32 %v2006, %v1793
    %2013 = vrot.lane.b32.xlu0 %v2010, 64
    %v2014 = vpop.permute.xlu0 %2013
    %v2016 = vmul.f32 %v2006, %v2014
    %2018 = vrot.lane.b32.xlu0 %v2016, 64
    %v2019 = vpop.permute.xlu0 %2018
    %v2021 = vadd.f32 %v2011, %v2019
    %v2022 = vtanh.pop %v2021
    %2024 = vrot.lane.b32.xlu0 %v2022, 64
    %v2025 = vpop.permute.xlu0 %2024
    %v2027 = vmul.f32 %v2008, %v2025
    %v2028 = vrot.slane %v670, 6
    %v2030 = vrot.slane %v898, 4
    %v2032 = vrot.slane %v1126, 2
    %v2034 = vrot.slane %v1571, 6
    %v2036 = vrot.slane %v1799, 4
    %v2039 = vrot.slane %v2027, 2
    %vm2041 = vcmask 1041408
    %v2042 = vsel %vm2041, %v443, %v2028
    %vm2043 = vcmask 1043456
    %v2044 = vsel %vm2043, %v2042, %v2030
    %vm2045 = vcmask 1045504
    %v2046 = vsel %vm2045, %v2044, %v2032
    %v2047 = vsel %vm2041, %v1344, %v2034
    %v2048 = vsel %vm2043, %v2047, %v2036
    %v2049 = vsel %vm2045, %v2048, %v2039
    %v2050 = vld [vmem:[%s6] sm:$0xff]
    %v2051 = vld [vmem:[%s6 + $0x8] sm:$0xff]
    %v2052 = vld [vmem:[%s6 + $0x10] sm:$0xff]
    %v2053 = vld [vmem:[%s6 + $0x18] sm:$0xff]
    %v2054 = vld [vmem:[%s6 + $0x20] sm:$0xff]
    %v2055 = vld [vmem:[%s6 + $0x28] sm:$0xff]
    %v2056 = vld [vmem:[%s6 + $0x30] sm:$0xff]
    %v2057 = vld [vmem:[%s6 + $0x38] sm:$0xff]
    %v2058 = vld [vmem:[%s7] sm:$0x1]
    %v2060 = vlaneseq
    %v2061 = vshrl.u32 %v2060, 7
    %v2062 = vsub.s32 0, %v2061
    %v2063 = vrot.slane %v2058, %v2062
    %v2066 = vsel %vm233, %v2046, 0
    %v2069 = vsel %vm233, %v2049, 0
    %2071 = vmatprep.subr.mxu0 0.0
    %2072 = vmatpush1.msra.mxu0 0.0
    %2073 = vmatprep.subr.mxu0 0.0
    %2074 = vmatpush1.msra.mxu0 0.0
    %2075 = vmatprep.subr.mxu0 0.0
    %2076 = vmatpush1.msra.mxu0 0.0
    %2077 = vmatprep.subr.mxu0 0.0
    %2078 = vmatpush1.msra.mxu0 0.0
    %2079 = vmatprep.subr.mxu0 0.0
    %2080 = vmatpush1.msra.mxu0 0.0
    %2081 = vmatprep.subr.mxu0 0.0
    %2082 = vmatpush1.msra.mxu0 0.0
    %2083 = vmatprep.subr.mxu0 0.0
    %2084 = vmatpush1.msra.mxu0 0.0
    %2085 = vmatprep.subr.mxu0 0.0
    %2086 = vmatpush1.msra.mxu0 0.0
    %2087 = vmatprep.subr.mxu0 0.0
    %2088 = vmatpush1.msra.mxu0 %v2057
    %2089 = vmatprep.subr.mxu0 0.0
    %2090 = vmatpush1.msra.mxu0 %v2056
    %2091 = vmatprep.subr.mxu0 0.0
    %2092 = vmatpush1.msra.mxu0 %v2055
    %2093 = vmatprep.subr.mxu0 0.0
    %2094 = vmatpush1.msra.mxu0 %v2054
    %2095 = vmatprep.subr.mxu0 0.0
    %2096 = vmatpush1.msra.mxu0 %v2053
    %2097 = vmatprep.subr.mxu0 0.0
    %2098 = vmatpush1.msra.mxu0 %v2052
    %2099 = vmatprep.subr.mxu0 0.0
    %2100 = vmatpush1.msra.mxu0 %v2051
    %2101 = vmatprep.subr.mxu0 0.0
    %2102 = vmatpush1.msra.mxu0 %v2050
    %2103 = vmatprep.subr.mxu0 0.0
    %2104 = vmatpush2.msra.mxu0 0.0
    %2105 = vmatprep.subr.mxu0 0.0
    %2106 = vmatpush2.msra.mxu0 0.0
    %2107 = vmatprep.subr.mxu0 0.0
    %2108 = vmatpush2.msra.mxu0 0.0
    %2109 = vmatprep.subr.mxu0 0.0
    %2110 = vmatpush2.msra.mxu0 0.0
    %2111 = vmatprep.subr.mxu0 0.0
    %2112 = vmatpush2.msra.mxu0 0.0
    %2113 = vmatprep.subr.mxu0 0.0
    %2114 = vmatpush2.msra.mxu0 0.0
    %2115 = vmatprep.subr.mxu0 0.0
    %2116 = vmatpush2.msra.mxu0 0.0
    %2117 = vmatprep.subr.mxu0 0.0
    %2118 = vmatpush2.msra.mxu0 0.0
    %2119 = vmatprep.subr.mxu0 0.0
    %2120 = vmatpush2.msra.mxu0 0.0
    %2121 = vmatprep.subr.mxu0 0.0
    %2122 = vmatpush2.msra.mxu0 0.0
    %2123 = vmatprep.subr.mxu0 0.0
    %2124 = vmatpush2.msra.mxu0 0.0
    %2125 = vmatprep.subr.mxu0 0.0
    %2126 = vmatpush2.msra.mxu0 0.0
    %2127 = vmatprep.subr.mxu0 0.0
    %2128 = vmatpush2.msra.mxu0 0.0
    %2129 = vmatprep.subr.mxu0 0.0
    %2130 = vmatpush2.msra.mxu0 0.0
    %2131 = vmatprep.subr.mxu0 0.0
    %2132 = vmatpush2.msra.mxu0 0.0
    %2133 = vmatprep.subr.mxu0 0.0
    %2134 = vmatpush2.msra.mxu0 0.0
    %2135 = vmatprep.mubr.f32.mxu0 0.0
    %2136 = vmatmul.mubr.f32.gmra.mxu0 %v2066
    %v2137 = vpop.f32.mrf.mxu0
    %v2138 = vadd.f32 %v2063, %v2137
    %v2139 = vpop.f32.mrf.mxu0
    %2140 = vmatprep.mubr.f32.mxu0 0.0
    %2141 = vmatmul.mubr.f32.gmra.mxu0 %v2069
    %v2142 = vpop.f32.mrf.mxu0
    %v2143 = vadd.f32 %v2063, %v2142
    %v2144 = vpop.f32.mrf.mxu0
    %2145 = vdwg.mxu0
    %vm2146 = vcmp.gt.f32.partialorder %v2138, 0.0
    %vm2147 = vcmp.gt.f32.partialorder %v2143, 0.0
    %v2148 = vmul.f32 %v2138, 0.01
    %v2149 = vmul.f32 %v2143, 0.01
    %v2150 = vsel %vm2146, %v2138, %v2148
    %v2151 = vsel %vm2147, %v2143, %v2149
    %v2152 = vld [vmem:[%s8] sm:$0x1]
    %v2154 = vlaneseq
    %v2155 = vshrl.u32 %v2154, 7
    %v2156 = vsub.s32 0, %v2155
    %v2157 = vrot.slane %v2152, %v2156
    %v2159 = vmul.f32 %v2150, %v2157
    %v2160 = vmul.f32 %v2151, %v2157
    %vm2161 = vcmask 261120
    %v2162 = vsel %vm2161, %v2159, 0.0
    %2163 = vadd.xlane.f32.xlu0 %v2162
    %v2164 = vpop.xlane.xlu0 %2163
    %v2165 = vsel %vm2161, %v2160, 0.0
    %2166 = vadd.xlane.f32.xlu0 %v2165
    %v2167 = vpop.xlane.xlu0 %2166
    %v2168 = vld [vmem:[#allocation2] sm:$0x1]
    %v2170 = vlaneseq
    %v2171 = vshrl.u32 %v2170, 7
    %v2172 = vsub.s32 0, %v2171
    %v2173 = vrot.slane %v2168, %v2172
    %v2175 = vadd.f32 %v2164, %v2173
    %v2176 = vadd.f32 %v2167, %v2173
    %v2177 = vxor.u32 %v2175, 2147483648
    %v2178 = vxor.u32 %v2176, 2147483648
    %v2179 = vmul.f32 %v2177, 1.442695
    %v2180 = vpow.pop %v2179
    %v2181 = vmul.f32 %v2178, 1.442695
    %v2182 = vpow.pop %v2181
    %v2183 = vadd.f32 %v2180, 1.0
    %v2184 = vadd.f32 %v2182, 1.0
    %v2185 = vrcp.pop %v2183
    %v2186 = vmul.f32 1.0, %v2185
    %v2187 = vrcp.pop %v2184
    %v2188 = vmul.f32 1.0, %v2187
    %vm2189 = vcmask 7168
    %2190 = vst.msk [vmem:[%s10] sm:$0xff] %vm2189, %v2186
    %2191 = vst.msk [vmem:[%s10 + $0x8] sm:$0xff] %vm2189, %v2188
    // Predicated region
    $region50: #{tpu_custom_call.1} parent=1 // pred_check
      _
    $region51: #{tpu_custom_call.1} parent=1 // pred_check_branch
      %2193 = sbr.rel (0) target = $region53
    $region52: #{tpu_custom_call.1} parent=1 // pred_region
      _
    $region53: #{tpu_custom_call.1} parent=1 // pred_fallthru
      _
    // Predicated region
    $region54: #{tpu_custom_call.1} parent=1 // pred_check
      _
    $region55: #{tpu_custom_call.1} parent=1 // pred_check_branch
      %2195 = sbr.rel (0) target = $region57
    $region56: #{tpu_custom_call.1} parent=1 // pred_region
      _
    $region57: #{tpu_custom_call.1} parent=1 // pred_fallthru
      _
    %2196 = vsyncpa [#allocation4], 1
    %2197 = vsyncpa [#allocation6], 1

</llo_original>
